<compile_context>
chip_gen: v7x
topology: tpu7x:2x2x1
jax: 0.10.0
libtpu: 0.0.40
codegen_flags: <defaults>
</compile_context>

<pallas_src>
import jax
import jax.numpy as jnp
from jax.experimental import pallas as pl
from jax.experimental.pallas import tpu as pltpu


def sae_kernel(x_ref, we_ref, be_ref, wd_ref, bd_ref, xrec_ref, z_ref, acc_ref):
    l = pl.program_id(1)
    n_lat = pl.num_programs(1)

    # Cast streamed activations to bf16 per tile (VPU has slack); this removes
    # the wrapper-side pad/cast pass over the largest streamed operand.
    x = x_ref[...].astype(we_ref.dtype)

    # ---- Encoder tile: Linear + ReLU (bf16 MXU, f32 accumulation) ----
    z = jnp.dot(x, we_ref[...], preferred_element_type=jnp.float32)
    z = jnp.maximum(z + be_ref[...], 0.0)                  # [TB, TL] f32
    z_ref[...] = z.astype(z_ref.dtype)

    # ---- Decoder: accumulate partial products across latent tiles ----
    @pl.when(l == 0)
    def _():
        acc_ref[...] = jnp.zeros_like(acc_ref)

    acc_ref[...] += jnp.dot(z.astype(wd_ref.dtype), wd_ref[...],
                            preferred_element_type=jnp.float32)

    @pl.when(l == n_lat - 1)
    def _():
        y = acc_ref[...] + bd_ref[...]                     # [TB, D_in_p] f32
        # Exact sigmoid (EUP exp + f32 divide); no approx error on the output.
        xrec_ref[...] = (1.0 / (1.0 + jnp.exp(-y))).astype(xrec_ref.dtype)


def _round_up(n, m):
    return ((n + m - 1) // m) * m


def _pad2(a, rows, cols):
    return jnp.pad(a, ((0, rows - a.shape[0]), (0, cols - a.shape[1])))


def _vmem_limit_bytes():
    # Generation-aware VMEM budget with headroom for compiler scratch and the
    # double-buffered streaming operands.
    try:
        cap = int(getattr(pltpu.get_tpu_info(), "vmem_capacity_bytes", 64 << 20))
    except Exception:
        cap = 64 << 20
    return min(cap * 3 // 4, 100 << 20)


def _spec(shape, index_map, single_buffer=False):
    # Single-buffer operands whose block index never changes (resident in
    # VMEM) -- halves their footprint. Graceful fallback if the running JAX
    # version does not accept the pipeline_mode kwarg.
    if single_buffer:
        try:
            return pl.BlockSpec(shape, index_map, pipeline_mode=pl.Buffered(1))
        except Exception:
            pass
    return pl.BlockSpec(shape, index_map)


def route_dae_forward(x, w_enc, b_enc, w_dec, b_dec, *,
                      block_b=512, block_lat=1024,
                      compute_dtype=jnp.bfloat16,
                      z_dtype=jnp.bfloat16, xrec_dtype=None):
    """x: [B, D_in]; w_enc: [D_in, D_lat]; b_enc: [1, D_lat];
       w_dec: [D_lat, D_in]; b_dec: [1, D_in].
       Returns (x_reconstructed [B, D_in], z [B, D_lat])."""
    B, D_in = x.shape
    D_lat = w_enc.shape[1]
    xrec_dtype = x.dtype if xrec_dtype is None else xrec_dtype

    # Feature padding (lane-dense, MXU-aligned). block_lat divides d_lat_p so
    # padded latent columns are exactly zero (ReLU(0)=0) and inert in the
    # decoder accumulation.
    d_in_p = _round_up(D_in, 128)
    block_lat = _round_up(min(block_lat, _round_up(D_lat, 128)), 128)
    d_lat_p = _round_up(D_lat, block_lat)
    n_lat = d_lat_p // block_lat
    resident = (n_lat == 1)  # weights stay resident across the whole grid

    # Batch tiling: cdiv grid + masked tail writes; no batch padding pass.
    block_b = _round_up(max(block_b, 8), 8)
    block_b_eff = B if B <= block_b else block_b
    n_b = pl.cdiv(B, block_b_eff)

    # x only gets a padded copy if D_in is not already lane-aligned.
    xp = x if d_in_p == D_in else jnp.pad(x, ((0, 0), (0, d_in_p - D_in)))
    # Weights/biases are small and fetched once (or once per latent tile):
    # pad + cast in the wrapper so their DMA / VMEM residency uses bf16.
    wep = _pad2(w_enc, d_in_p, d_lat_p).astype(compute_dtype)
    bep = _pad2(b_enc, 1, d_lat_p).astype(jnp.float32)
    wdp = _pad2(w_dec, d_lat_p, d_in_p).astype(compute_dtype)
    bdp = _pad2(b_dec, 1, d_in_p).astype(jnp.float32)

    x_rec_p, z_p = pl.pallas_call(
        sae_kernel,
        out_shape=(
            jax.ShapeDtypeStruct((B, d_in_p), xrec_dtype),   # x_reconstructed
            jax.ShapeDtypeStruct((B, d_lat_p), z_dtype),     # z
        ),
        grid_spec=pltpu.PrefetchScalarGridSpec(
            num_scalar_prefetch=0,
            grid=(n_b, n_lat),
            in_specs=[
                # x: batch-tiled, reused across the latent axis.
                pl.BlockSpec((block_b_eff, d_in_p), lambda b, l: (b, 0)),
                # Encoder weight / bias: latent-tiled columns.
                _spec((d_in_p, block_lat), lambda b, l: (0, l), resident),
                _spec((1, block_lat), lambda b, l: (0, l), resident),
                # Decoder weight: latent-tiled rows.
                _spec((block_lat, d_in_p), lambda b, l: (l, 0), resident),
                # Decoder bias: constant -> always single-buffered.
                _spec((1, d_in_p), lambda b, l: (0, 0), True),
            ],
            out_specs=[
                # x_rec resident across the latent (reduction) axis; written
                # only at the last latent step via pl.when.
                pl.BlockSpec((block_b_eff, d_in_p), lambda b, l: (b, 0)),
                pl.BlockSpec((block_b_eff, block_lat), lambda b, l: (b, l)),
            ],
            scratch_shapes=[pltpu.VMEM((block_b_eff, d_in_p), jnp.float32)],
        ),
        compiler_params=pltpu.CompilerParams(
            # TODO(synk): verify the batch axis actually shards across v7x's
            # two TensorCores; if not, switch to pltpu.CORE_PARALLEL/core_map.
            dimension_semantics=("parallel", "arbitrary"),
            vmem_limit_bytes=_vmem_limit_bytes(),
        ),
    )(xp, wep, bep, wdp, bdp)

    # Only column-slice when feature dims actually needed padding (no extra
    # pass over the outputs when the model dims are already 128-aligned).
    x_rec = x_rec_p if d_in_p == D_in else x_rec_p[:, :D_in]
    z = z_p if d_lat_p == D_lat else z_p[:, :D_lat]
    return x_rec, z


def init_params(key, input_dim, latent_dim, dtype=jnp.float32):
    """Deterministic init mimicking nn.Linear default (U[-1/sqrt(fan_in), +])."""
    k1, k2, k3, k4 = jax.random.split(key, 4)
    bound_e = 1.0 / jnp.sqrt(jnp.asarray(input_dim, jnp.float32))
    bound_d = 1.0 / jnp.sqrt(jnp.asarray(latent_dim, jnp.float32))
    # Stored as [in, out] (transpose of PyTorch's [out, in]).
    w_enc = jax.random.uniform(k1, (input_dim, latent_dim), dtype, -bound_e, bound_e)
    b_enc = jax.random.uniform(k2, (1, latent_dim), dtype, -bound_e, bound_e)
    w_dec = jax.random.uniform(k3, (latent_dim, input_dim), dtype, -bound_d, bound_d)
    b_dec = jax.random.uniform(k4, (1, input_dim), dtype, -bound_d, bound_d)
    return w_enc, b_enc, w_dec, b_dec


if __name__ == "__main__":
    key = jax.random.PRNGKey(0)
    # Small but kernel-shaped: lane-aligned D_in (no x pad pass), D_lat=192
    # exercises latent padding, B=300 exercises the masked batch tail.
    B, INPUT_DIM, LATENT_DIM = 300, 256, 192

    kx, kp = jax.random.split(key)
    x = jax.random.normal(kx, (B, INPUT_DIM), jnp.float32)
    w_enc, b_enc, w_dec, b_dec = init_params(kp, INPUT_DIM, LATENT_DIM)

    # Pure-JAX reference with the same bf16 operand rounding the kernel uses
    # (f32 accumulation, exact sigmoid).
    bf = jnp.bfloat16
    x32 = x.astype(bf).astype(jnp.float32)
    we32 = w_enc.astype(bf).astype(jnp.float32)
    wd32 = w_dec.astype(bf).astype(jnp.float32)
    z_exp = jnp.maximum(x32 @ we32 + b_enc, 0.0)
    xr_exp = jax.nn.sigmoid(z_exp.astype(bf).astype(jnp.float32) @ wd32 + b_dec)

    def check(x_rec, z, tag):
        assert x_rec.shape == (B, INPUT_DIM) and z.shape == (B, LATENT_DIM), tag
        z32 = z.astype(jnp.float32)
        xr32 = x_rec.astype(jnp.float32)
        z_err = float(jnp.max(jnp.abs(z32 - z_exp)))
        xr_err = float(jnp.max(jnp.abs(xr32 - xr_exp)))
        assert jnp.allclose(z32, z_exp, atol=2e-2, rtol=2e-2), (tag, z_err)
        assert jnp.allclose(xr32, xr_exp, atol=2e-2), (tag, xr_err)

    # 1) Default (performance) configuration: single batch tile, single
    #    latent tile, fully resident single-buffered weights.
    out = route_dae_forward(x, w_enc, b_enc, w_dec, b_dec)
    jax.block_until_ready(out)
    check(*out, "default")

    # 2) Small tiles: exercises the multi-batch-tile path with a masked
    #    partial tail (300 = 2*128 + 44) and the latent-tiled accumulator.
    out2 = route_dae_forward(x, w_enc, b_enc, w_dec, b_dec,
                             block_b=128, block_lat=128)
    jax.block_until_ready(out2)
    check(*out2, "tiled")

    print("KERNEL_OK")
</pallas_src>

<mosaic_0001>
module attributes {stable_mosaic.version = 11 : i64} {
  func.func @sae_kernel(%arg0: i32, %arg1: i32, %arg2: memref<300x256xf32, #tpu.memory_space<vmem>>, %arg3: memref<256x256xbf16, #tpu.memory_space<vmem>>, %arg4: memref<1x256xf32, #tpu.memory_space<vmem>>, %arg5: memref<256x256xbf16, #tpu.memory_space<vmem>>, %arg6: memref<1x256xf32, #tpu.memory_space<vmem>>, %arg7: memref<300x256xf32, #tpu.memory_space<vmem>>, %arg8: memref<300x256xbf16, #tpu.memory_space<vmem>>, %arg9: memref<300x256xf32, #tpu.memory_space<vmem>>) attributes {dimension_semantics = [#tpu.dimension_semantics<parallel>, #tpu.dimension_semantics<arbitrary>], iteration_bounds = array<i64: 1, 1>, scalar_prefetch = 0 : i64, scratch_operands = 1 : i64, tpu.core_type = #tpu.core_type<tc>, window_params = [{transform_indices = @transform_0, window_bounds = array<i64: 300, 256>}, {pipeline_mode = #tpu.pipeline_mode<synchronous>, transform_indices = @transform_1, window_bounds = array<i64: 256, 256>}, {pipeline_mode = #tpu.pipeline_mode<synchronous>, transform_indices = @transform_2, window_bounds = array<i64: 1, 256>}, {pipeline_mode = #tpu.pipeline_mode<synchronous>, transform_indices = @transform_3, window_bounds = array<i64: 256, 256>}, {pipeline_mode = #tpu.pipeline_mode<synchronous>, transform_indices = @transform_4, window_bounds = array<i64: 1, 256>}, {transform_indices = @transform_5, window_bounds = array<i64: 300, 256>}, {transform_indices = @transform_6, window_bounds = array<i64: 300, 256>}]} {
    %c0 = arith.constant 0 : index
    %c0_0 = arith.constant 0 : index
    %0 = vector.load %arg2[%c0, %c0_0] : memref<300x256xf32, #tpu.memory_space<vmem>>, vector<300x256xf32>
    %1 = arith.truncf %0 : vector<300x256xf32> to vector<300x256xbf16>
    %c0_1 = arith.constant 0 : index
    %c0_2 = arith.constant 0 : index
    %2 = vector.load %arg3[%c0_1, %c0_2] : memref<256x256xbf16, #tpu.memory_space<vmem>>, vector<256x256xbf16>
    %cst = arith.constant dense<0.000000e+00> : vector<300x256xf32>
    %3 = tpu.matmul %1, %2, %cst {dimension_numbers = #tpu.dot_dimension_numbers<[1], [0], [0], [1], [0, 0, 1, 1], [], []>} : vector<300x256xbf16>, vector<256x256xbf16>, vector<300x256xf32> -> vector<300x256xf32>
    %c0_3 = arith.constant 0 : index
    %c0_4 = arith.constant 0 : index
    %4 = vector.load %arg4[%c0_3, %c0_4] : memref<1x256xf32, #tpu.memory_space<vmem>>, vector<1x256xf32>
    %5 = vector.broadcast %4 : vector<1x256xf32> to vector<300x256xf32>
    %6 = arith.addf %3, %5 : vector<300x256xf32>
    %cst_5 = arith.constant 0.000000e+00 : f32
    %7 = vector.broadcast %cst_5 : f32 to vector<300x256xf32>
    %8 = arith.maximumf %6, %7 : vector<300x256xf32>
    %9 = arith.truncf %8 : vector<300x256xf32> to vector<300x256xbf16>
    %c0_6 = arith.constant 0 : index
    %c0_7 = arith.constant 0 : index
    %10 = vector.load %arg8[%c0_6, %c0_7] : memref<300x256xbf16, #tpu.memory_space<vmem>>, vector<300x256xbf16>
    tpu.vector_store %arg8[%c0_6, %c0_7], %9 {strides = array<i32>} : memref<300x256xbf16, #tpu.memory_space<vmem>>, vector<300x256xbf16>,
    %c0_i32 = arith.constant 0 : i32
    %11 = arith.cmpi eq, %arg1, %c0_i32 : i32
    %12 = arith.extui %11 : i1 to i32
    %c0_i32_8 = arith.constant 0 : i32
    %13 = arith.cmpi ne, %12, %c0_i32_8 : i32
    scf.if %13 {
      %cst_18 = arith.constant 0.000000e+00 : f32
      %23 = vector.broadcast %cst_18 : f32 to vector<300x256xf32>
      %c0_19 = arith.constant 0 : index
      %c0_20 = arith.constant 0 : index
      %24 = vector.load %arg9[%c0_19, %c0_20] : memref<300x256xf32, #tpu.memory_space<vmem>>, vector<300x256xf32>
      tpu.vector_store %arg9[%c0_19, %c0_20], %23 {strides = array<i32>} : memref<300x256xf32, #tpu.memory_space<vmem>>, vector<300x256xf32>,
    } else {
    }
    %c0_9 = arith.constant 0 : index
    %c0_10 = arith.constant 0 : index
    %14 = vector.load %arg9[%c0_9, %c0_10] : memref<300x256xf32, #tpu.memory_space<vmem>>, vector<300x256xf32>
    %15 = arith.truncf %8 : vector<300x256xf32> to vector<300x256xbf16>
    %c0_11 = arith.constant 0 : index
    %c0_12 = arith.constant 0 : index
    %16 = vector.load %arg5[%c0_11, %c0_12] : memref<256x256xbf16, #tpu.memory_space<vmem>>, vector<256x256xbf16>
    %cst_13 = arith.constant dense<0.000000e+00> : vector<300x256xf32>
    %17 = tpu.matmul %15, %16, %cst_13 {dimension_numbers = #tpu.dot_dimension_numbers<[1], [0], [0], [1], [0, 0, 1, 1], [], []>} : vector<300x256xbf16>, vector<256x256xbf16>, vector<300x256xf32> -> vector<300x256xf32>
    %18 = arith.addf %14, %17 : vector<300x256xf32>
    %c0_14 = arith.constant 0 : index
    %c0_15 = arith.constant 0 : index
    %19 = vector.load %arg9[%c0_14, %c0_15] : memref<300x256xf32, #tpu.memory_space<vmem>>, vector<300x256xf32>
    tpu.vector_store %arg9[%c0_14, %c0_15], %18 {strides = array<i32>} : memref<300x256xf32, #tpu.memory_space<vmem>>, vector<300x256xf32>,
    %c0_i32_16 = arith.constant 0 : i32
    %20 = arith.cmpi eq, %arg1, %c0_i32_16 : i32
    %21 = arith.extui %20 : i1 to i32
    %c0_i32_17 = arith.constant 0 : i32
    %22 = arith.cmpi ne, %21, %c0_i32_17 : i32
    scf.if %22 {
      %c0_18 = arith.constant 0 : index
      %c0_19 = arith.constant 0 : index
      %23 = vector.load %arg9[%c0_18, %c0_19] : memref<300x256xf32, #tpu.memory_space<vmem>>, vector<300x256xf32>
      %c0_20 = arith.constant 0 : index
      %c0_21 = arith.constant 0 : index
      %24 = vector.load %arg6[%c0_20, %c0_21] : memref<1x256xf32, #tpu.memory_space<vmem>>, vector<1x256xf32>
      %25 = vector.broadcast %24 : vector<1x256xf32> to vector<300x256xf32>
      %26 = arith.addf %23, %25 : vector<300x256xf32>
      %cst_22 = arith.constant 0.000000e+00 : f32
      %27 = vector.broadcast %cst_22 : f32 to vector<300x256xf32>
      %28 = arith.subf %27, %26 : vector<300x256xf32>
      %29 = math.exp %28 : vector<300x256xf32>
      %cst_23 = arith.constant 1.000000e+00 : f32
      %30 = vector.broadcast %cst_23 : f32 to vector<300x256xf32>
      %31 = arith.addf %30, %29 : vector<300x256xf32>
      %cst_24 = arith.constant 1.000000e+00 : f32
      %32 = vector.broadcast %cst_24 : f32 to vector<300x256xf32>
      %33 = arith.divf %32, %31 : vector<300x256xf32>
      %c0_25 = arith.constant 0 : index
      %c0_26 = arith.constant 0 : index
      %34 = vector.load %arg7[%c0_25, %c0_26] : memref<300x256xf32, #tpu.memory_space<vmem>>, vector<300x256xf32>
      tpu.vector_store %arg7[%c0_25, %c0_26], %33 {strides = array<i32>} : memref<300x256xf32, #tpu.memory_space<vmem>>, vector<300x256xf32>,
    } else {
    }
    return
  }
  func.func @transform_0(%arg0: i32, %arg1: i32) -> (i32, i32) {
    %c0_i32 = arith.constant 0 : i32
    %c0_i32_0 = arith.constant 0 : i32
    return %arg0, %c0_i32 : i32, i32
  }
  func.func @transform_1(%arg0: i32, %arg1: i32) -> (i32, i32) {
    %c0_i32 = arith.constant 0 : i32
    %c0_i32_0 = arith.constant 0 : i32
    return %c0_i32, %arg1 : i32, i32
  }
  func.func @transform_2(%arg0: i32, %arg1: i32) -> (i32, i32) {
    %c0_i32 = arith.constant 0 : i32
    %c0_i32_0 = arith.constant 0 : i32
    return %c0_i32, %arg1 : i32, i32
  }
  func.func @transform_3(%arg0: i32, %arg1: i32) -> (i32, i32) {
    %c0_i32 = arith.constant 0 : i32
    %c0_i32_0 = arith.constant 0 : i32
    return %arg1, %c0_i32 : i32, i32
  }
  func.func @transform_4(%arg0: i32, %arg1: i32) -> (i32, i32) {
    %c0_i32 = arith.constant 0 : i32
    %c0_i32_0 = arith.constant 0 : i32
    %c0_i32_1 = arith.constant 0 : i32
    return %c0_i32, %c0_i32_0 : i32, i32
  }
  func.func @transform_5(%arg0: i32, %arg1: i32) -> (i32, i32) {
    %c0_i32 = arith.constant 0 : i32
    %c0_i32_0 = arith.constant 0 : i32
    return %arg0, %c0_i32 : i32, i32
  }
  func.func @transform_6(%arg0: i32, %arg1: i32) -> (i32, i32) {
    %c0_i32 = arith.constant 0 : i32
    return %arg0, %arg1 : i32, i32
  }
}

</mosaic_0001>

<llo_original>
// kernel: tpu_custom_call.1
$region0: #{tpu_custom_call.1}
  #allocation0 [shape = 'u32[]', space=smem, size = 0x4, offset = 0x4, fixed_abs, tag = 'smem constant byte address 0x4 - core index']
  #allocation1 [shape = 'u32[144,128]{1,0:T(1,128)}', space=vmem, size = 0x12000, scoped, tag = 'internal scratch']
  #allocation2 [shape = 'f32[300,256]{1,0:T(8,128)}', space=vmem, size = 0x4c000, scoped, tag = 'scratch operand']
  %s0 = inlined_call_operand.hbm [shape: f32[300,256], index: 0, kind: input, shape index: {}]
  %s1 = inlined_call_operand.hbm [shape: bf16[256,256], index: 1, kind: input, shape index: {}]
  %s2 = inlined_call_operand.vmem [shape: f32[1,256], index: 2, kind: input, shape index: {}]
  %s3 = inlined_call_operand.hbm [shape: bf16[256,256], index: 3, kind: input, shape index: {}]
  %s4 = inlined_call_operand.vmem [shape: f32[1,256], index: 4, kind: input, shape index: {}]
  %s5 = inlined_call_operand.hbm [shape: f32[300,256], index: 5, kind: output, shape index: {0}]
  %s6 = inlined_call_operand.hbm [shape: bf16[300,256], index: 6, kind: output, shape index: {1}]
  %7 = xla_tuple %s5, %s6
  %s8 = sld [smem:[#allocation0]]
  $region58: #{tpu_custom_call.1} parent=0
    _
  %s10 = ssub.s32 1, %s8
  %s11 = scalar_select 0, %s10, %s8
  $region1: #{tpu_custom_call.1} parent=0
    #allocation3 [shape = 'u8[311296]{0}', space=vmem, size = 0x4c000, scoped, tag = 'input window, operand 0, single buffered']
    #allocation4 [shape = 's32[1]{0}', space=sflag, size = 0x4, scoped, tag = 'scoped memory for tpu_custom_call.1']
    #allocation5 [shape = 's32[1]{0}', space=sflag, size = 0x4, scoped, tag = 'scoped memory for tpu_custom_call.1']
    #allocation6 [shape = 'u8[131072]{0}', space=vmem, size = 0x20000, scoped, tag = 'input window, operand 1, single buffered']
    #allocation7 [shape = 's32[1]{0}', space=sflag, size = 0x4, scoped, tag = 'scoped memory for tpu_custom_call.1']
    #allocation8 [shape = 'u8[131072]{0}', space=vmem, size = 0x20000, scoped, tag = 'input window, operand 3, single buffered']
    #allocation9 [shape = 'u8[311296]{0}', space=vmem, size = 0x4c000, scoped, tag = 'output window, operand 0, single buffered']
    #allocation10 [shape = 'u8[155648]{0}', space=vmem, size = 0x26000, scoped, tag = 'output window, operand 1, single buffered']
    #allocation11 [shape = 's32[1]{0}', space=sflag, size = 0x4, scoped, tag = 'scoped memory for tpu_custom_call.1']
    %12 = vsyncpa [#allocation4], 0
    %13 = vsyncpa [#allocation7], 0
    %14 = vsyncpa [#allocation5], 0
    %15 = vsyncpa [#allocation11], 0
    // Predicated region
    $region2: #{tpu_custom_call.1} parent=1 // pred_check
      _
    $region3: #{tpu_custom_call.1} parent=1 // pred_check_branch
      %17 = sbr.rel (0) target = $region5
    $region4: #{tpu_custom_call.1} parent=1 // pred_region
      %s19 = ssub.s32 9728, 9728
      %20 = vsyncadd [#allocation4], %s19
      %s21 = sshll.u32 [#allocation3], 4
      %s22 = int_to_ptr.vmem [resolvable:$true] %s21
      %27 = dma.hbm_to_vmem [thread:$0]  %s0, 9728, %s22, [#allocation4], 256, 256, 16
    $region5: #{tpu_custom_call.1} parent=1 // pred_fallthru
      _
    // Predicated region
    $region6: #{tpu_custom_call.1} parent=1 // pred_check
      _
    $region7: #{tpu_custom_call.1} parent=1 // pred_check_branch
      %29 = sbr.rel (0) target = $region9
    $region8: #{tpu_custom_call.1} parent=1 // pred_region
      %s31 = ssub.s32 4096, 4096
      %32 = vsyncadd [#allocation7], %s31
      %s33 = sshll.u32 [#allocation6], 4
      %s34 = int_to_ptr.vmem [resolvable:$true] %s33
      %39 = dma.hbm_to_vmem [thread:$0]  %s1, 4096, %s34, [#allocation7], 128, 128, 8
    $region9: #{tpu_custom_call.1} parent=1 // pred_fallthru
      _
    // Predicated region
    $region10: #{tpu_custom_call.1} parent=1 // pred_check
      _
    $region11: #{tpu_custom_call.1} parent=1 // pred_check_branch
      %41 = sbr.rel (0) target = $region13
    $region12: #{tpu_custom_call.1} parent=1 // pred_region
      _
    $region13: #{tpu_custom_call.1} parent=1 // pred_fallthru
      _
    // Predicated region
    $region14: #{tpu_custom_call.1} parent=1 // pred_check
      _
    $region15: #{tpu_custom_call.1} parent=1 // pred_check_branch
      %43 = sbr.rel (0) target = $region17
    $region16: #{tpu_custom_call.1} parent=1 // pred_region
      %s45 = ssub.s32 4096, 4096
      %46 = vsyncadd [#allocation7], %s45
      %s47 = sshll.u32 [#allocation8], 4
      %s48 = int_to_ptr.vmem [resolvable:$true] %s47
      %53 = dma.hbm_to_vmem [thread:$0]  %s3, 4096, %s48, [#allocation7], 128, 128, 8
    $region17: #{tpu_custom_call.1} parent=1 // pred_fallthru
      _
    // Predicated region
    $region18: #{tpu_custom_call.1} parent=1 // pred_check
      _
    $region19: #{tpu_custom_call.1} parent=1 // pred_check_branch
      %55 = sbr.rel (0) target = $region21
    $region20: #{tpu_custom_call.1} parent=1 // pred_region
      _
    $region21: #{tpu_custom_call.1} parent=1 // pred_fallthru
      _
    // Predicated region
    $region22: #{tpu_custom_call.1} parent=1 // pred_check
      _
    $region23: #{tpu_custom_call.1} parent=1 // pred_check_branch
      %57 = sbr.rel (0) target = $region25
    $region24: #{tpu_custom_call.1} parent=1 // pred_region
      %58 = dma.done [#allocation4], 9728
    $region25: #{tpu_custom_call.1} parent=1 // pred_fallthru
      _
    // Predicated region
    $region26: #{tpu_custom_call.1} parent=1 // pred_check
      _
    $region27: #{tpu_custom_call.1} parent=1 // pred_check_branch
      %60 = sbr.rel (0) target = $region29
    $region28: #{tpu_custom_call.1} parent=1 // pred_region
      %61 = dma.done [#allocation7], 4096
    $region29: #{tpu_custom_call.1} parent=1 // pred_fallthru
      _
    // Predicated region
    $region30: #{tpu_custom_call.1} parent=1 // pred_check
      _
    $region31: #{tpu_custom_call.1} parent=1 // pred_check_branch
      %63 = sbr.rel (0) target = $region33
    $region32: #{tpu_custom_call.1} parent=1 // pred_region
      %64 = dma.done [#allocation7], 4096
    $region33: #{tpu_custom_call.1} parent=1 // pred_fallthru
      _
    %v65 = vld [vmem:[#allocation3] sm:$0xff]
    %v66 = vld [vmem:[#allocation3 + $0x8] sm:$0xff]
    %v67 = vld [vmem:[#allocation3 + $0x10] sm:$0xff]
    %v68 = vld [vmem:[#allocation3 + $0x18] sm:$0xff]
    %v69 = vld [vmem:[#allocation3 + $0x20] sm:$0xff]
    %v70 = vld [vmem:[#allocation3 + $0x28] sm:$0xff]
    %v71 = vld [vmem:[#allocation3 + $0x30] sm:$0xff]
    %v72 = vld [vmem:[#allocation3 + $0x38] sm:$0xff]
    %v73 = vld [vmem:[#allocation3 + $0x40] sm:$0xff]
    %v74 = vld [vmem:[#allocation3 + $0x48] sm:$0xff]
    %v75 = vld [vmem:[#allocation3 + $0x50] sm:$0xff]
    %v76 = vld [vmem:[#allocation3 + $0x58] sm:$0xff]
    %v77 = vld [vmem:[#allocation3 + $0x60] sm:$0xff]
    %v78 = vld [vmem:[#allocation3 + $0x68] sm:$0xff]
    %v79 = vld [vmem:[#allocation3 + $0x70] sm:$0xff]
    %v80 = vld [vmem:[#allocation3 + $0x78] sm:$0xff]
    %v81 = vld [vmem:[#allocation3 + $0x80] sm:$0xff]
    %v82 = vld [vmem:[#allocation3 + $0x88] sm:$0xff]
    %v83 = vld [vmem:[#allocation3 + $0x90] sm:$0xff]
    %v84 = vld [vmem:[#allocation3 + $0x98] sm:$0xff]
    %v85 = vld [vmem:[#allocation3 + $0xa0] sm:$0xff]
    %v86 = vld [vmem:[#allocation3 + $0xa8] sm:$0xff]
    %v87 = vld [vmem:[#allocation3 + $0xb0] sm:$0xff]
    %v88 = vld [vmem:[#allocation3 + $0xb8] sm:$0xff]
    %v89 = vld [vmem:[#allocation3 + $0xc0] sm:$0xff]
    %v90 = vld [vmem:[#allocation3 + $0xc8] sm:$0xff]
    %v91 = vld [vmem:[#allocation3 + $0xd0] sm:$0xff]
    %v92 = vld [vmem:[#allocation3 + $0xd8] sm:$0xff]
    %v93 = vld [vmem:[#allocation3 + $0xe0] sm:$0xff]
    %v94 = vld [vmem:[#allocation3 + $0xe8] sm:$0xff]
    %v95 = vld [vmem:[#allocation3 + $0xf0] sm:$0xff]
    %v96 = vld [vmem:[#allocation3 + $0xf8] sm:$0xff]
    %v97 = vld [vmem:[#allocation3 + $0x100] sm:$0xff]
    %v98 = vld [vmem:[#allocation3 + $0x108] sm:$0xff]
    %v99 = vld [vmem:[#allocation3 + $0x110] sm:$0xff]
    %v100 = vld [vmem:[#allocation3 + $0x118] sm:$0xff]
    %v101 = vld [vmem:[#allocation3 + $0x120] sm:$0xff]
    %v102 = vld [vmem:[#allocation3 + $0x128] sm:$0xff]
    %v103 = vld [vmem:[#allocation3 + $0x130] sm:$0xff]
    %v104 = vld [vmem:[#allocation3 + $0x138] sm:$0xff]
    %v105 = vld [vmem:[#allocation3 + $0x140] sm:$0xff]
    %v106 = vld [vmem:[#allocation3 + $0x148] sm:$0xff]
    %v107 = vld [vmem:[#allocation3 + $0x150] sm:$0xff]
    %v108 = vld [vmem:[#allocation3 + $0x158] sm:$0xff]
    %v109 = vld [vmem:[#allocation3 + $0x160] sm:$0xff]
    %v110 = vld [vmem:[#allocation3 + $0x168] sm:$0xff]
    %v111 = vld [vmem:[#allocation3 + $0x170] sm:$0xff]
    %v112 = vld [vmem:[#allocation3 + $0x178] sm:$0xff]
    %v113 = vld [vmem:[#allocation3 + $0x180] sm:$0xff]
    %v114 = vld [vmem:[#allocation3 + $0x188] sm:$0xff]
    %v115 = vld [vmem:[#allocation3 + $0x190] sm:$0xff]
    %v116 = vld [vmem:[#allocation3 + $0x198] sm:$0xff]
    %v117 = vld [vmem:[#allocation3 + $0x1a0] sm:$0xff]
    %v118 = vld [vmem:[#allocation3 + $0x1a8] sm:$0xff]
    %v119 = vld [vmem:[#allocation3 + $0x1b0] sm:$0xff]
    %v120 = vld [vmem:[#allocation3 + $0x1b8] sm:$0xff]
    %v121 = vld [vmem:[#allocation3 + $0x1c0] sm:$0xff]
    %v122 = vld [vmem:[#allocation3 + $0x1c8] sm:$0xff]
    %v123 = vld [vmem:[#allocation3 + $0x1d0] sm:$0xff]
    %v124 = vld [vmem:[#allocation3 + $0x1d8] sm:$0xff]
    %v125 = vld [vmem:[#allocation3 + $0x1e0] sm:$0xff]
    %v126 = vld [vmem:[#allocation3 + $0x1e8] sm:$0xff]
    %v127 = vld [vmem:[#allocation3 + $0x1f0] sm:$0xff]
    %v128 = vld [vmem:[#allocation3 + $0x1f8] sm:$0xff]
    %v129 = vld [vmem:[#allocation3 + $0x200] sm:$0xff]
    %v130 = vld [vmem:[#allocation3 + $0x208] sm:$0xff]
    %v131 = vld [vmem:[#allocation3 + $0x210] sm:$0xff]
    %v132 = vld [vmem:[#allocation3 + $0x218] sm:$0xff]
    %v133 = vld [vmem:[#allocation3 + $0x220] sm:$0xff]
    %v134 = vld [vmem:[#allocation3 + $0x228] sm:$0xff]
    %v135 = vld [vmem:[#allocation3 + $0x230] sm:$0xff]
    %v136 = vld [vmem:[#allocation3 + $0x238] sm:$0xff]
    %v137 = vld [vmem:[#allocation3 + $0x240] sm:$0xff]
    %v138 = vld [vmem:[#allocation3 + $0x248] sm:$0xff]
    %v139 = vld [vmem:[#allocation3 + $0x250] sm:$0xf]
    %v140 = vld [vmem:[#allocation3 + $0x258] sm:$0xf]
    %v141 = vpack.c.bf16 %v67, %v65
    %v142 = vpack.c.bf16 %v68, %v66
    %v143 = vpack.c.bf16 %v71, %v69
    %v144 = vpack.c.bf16 %v72, %v70
    %v145 = vpack.c.bf16 %v75, %v73
    %v146 = vpack.c.bf16 %v76, %v74
    %v147 = vpack.c.bf16 %v79, %v77
    %v148 = vpack.c.bf16 %v80, %v78
    %v149 = vpack.c.bf16 %v83, %v81
    %v150 = vpack.c.bf16 %v84, %v82
    %v151 = vpack.c.bf16 %v87, %v85
    %v152 = vpack.c.bf16 %v88, %v86
    %v153 = vpack.c.bf16 %v91, %v89
    %v154 = vpack.c.bf16 %v92, %v90
    %v155 = vpack.c.bf16 %v95, %v93
    %v156 = vpack.c.bf16 %v96, %v94
    %v157 = vpack.c.bf16 %v99, %v97
    %v158 = vpack.c.bf16 %v100, %v98
    %v159 = vpack.c.bf16 %v103, %v101
    %v160 = vpack.c.bf16 %v104, %v102
    %v161 = vpack.c.bf16 %v107, %v105
    %v162 = vpack.c.bf16 %v108, %v106
    %v163 = vpack.c.bf16 %v111, %v109
    %v164 = vpack.c.bf16 %v112, %v110
    %v165 = vpack.c.bf16 %v115, %v113
    %v166 = vpack.c.bf16 %v116, %v114
    %v167 = vpack.c.bf16 %v119, %v117
    %v168 = vpack.c.bf16 %v120, %v118
    %v169 = vpack.c.bf16 %v123, %v121
    %v170 = vpack.c.bf16 %v124, %v122
    %v171 = vpack.c.bf16 %v127, %v125
    %v172 = vpack.c.bf16 %v128, %v126
    %v173 = vpack.c.bf16 %v131, %v129
    %v174 = vpack.c.bf16 %v132, %v130
    %v175 = vpack.c.bf16 %v135, %v133
    %v176 = vpack.c.bf16 %v136, %v134
    %v177 = vpack.c.bf16 %v139, %v137
    %v178 = vpack.c.bf16 %v140, %v138
    %v179 = vld [vmem:[#allocation6] sm:$0xff]
    %v180 = vld [vmem:[#allocation6 + $0x8] sm:$0xff]
    %v181 = vld [vmem:[#allocation6 + $0x10] sm:$0xff]
    %v182 = vld [vmem:[#allocation6 + $0x18] sm:$0xff]
    %v183 = vld [vmem:[#allocation6 + $0x20] sm:$0xff]
    %v184 = vld [vmem:[#allocation6 + $0x28] sm:$0xff]
    %v185 = vld [vmem:[#allocation6 + $0x30] sm:$0xff]
    %v186 = vld [vmem:[#allocation6 + $0x38] sm:$0xff]
    %v187 = vld [vmem:[#allocation6 + $0x40] sm:$0xff]
    %v188 = vld [vmem:[#allocation6 + $0x48] sm:$0xff]
    %v189 = vld [vmem:[#allocation6 + $0x50] sm:$0xff]
    %v190 = vld [vmem:[#allocation6 + $0x58] sm:$0xff]
    %v191 = vld [vmem:[#allocation6 + $0x60] sm:$0xff]
    %v192 = vld [vmem:[#allocation6 + $0x68] sm:$0xff]
    %v193 = vld [vmem:[#allocation6 + $0x70] sm:$0xff]
    %v194 = vld [vmem:[#allocation6 + $0x78] sm:$0xff]
    %v195 = vld [vmem:[#allocation6 + $0x80] sm:$0xff]
    %v196 = vld [vmem:[#allocation6 + $0x88] sm:$0xff]
    %v197 = vld [vmem:[#allocation6 + $0x90] sm:$0xff]
    %v198 = vld [vmem:[#allocation6 + $0x98] sm:$0xff]
    %v199 = vld [vmem:[#allocation6 + $0xa0] sm:$0xff]
    %v200 = vld [vmem:[#allocation6 + $0xa8] sm:$0xff]
    %v201 = vld [vmem:[#allocation6 + $0xb0] sm:$0xff]
    %v202 = vld [vmem:[#allocation6 + $0xb8] sm:$0xff]
    %v203 = vld [vmem:[#allocation6 + $0xc0] sm:$0xff]
    %v204 = vld [vmem:[#allocation6 + $0xc8] sm:$0xff]
    %v205 = vld [vmem:[#allocation6 + $0xd0] sm:$0xff]
    %v206 = vld [vmem:[#allocation6 + $0xd8] sm:$0xff]
    %v207 = vld [vmem:[#allocation6 + $0xe0] sm:$0xff]
    %v208 = vld [vmem:[#allocation6 + $0xe8] sm:$0xff]
    %v209 = vld [vmem:[#allocation6 + $0xf0] sm:$0xff]
    %v210 = vld [vmem:[#allocation6 + $0xf8] sm:$0xff]
    %v211 = vld [vmem:[%s2] sm:$0x3]
    %v213 = vlaneseq
    %v214 = vshrl.u32 %v213, 7
    %v215 = vsub.s32 0, %v214
    %v216 = vrot.slane %v211, %v215
    %v217 = vlaneseq
    %v218 = vshrl.u32 %v217, 7
    %v219 = vsub.s32 1, %v218
    %v220 = vrot.slane %v211, %v219
    %v255 = vunpack.c.l.b16 %v179
    %v256 = vunpack.c.h.b16 %v179
    %v257 = vunpack.c.l.b16 %v180
    %v258 = vunpack.c.h.b16 %v180
    %v259 = vunpack.c.l.b16 %v181
    %v260 = vunpack.c.h.b16 %v181
    %v261 = vunpack.c.l.b16 %v182
    %v262 = vunpack.c.h.b16 %v182
    %v263 = vunpack.c.l.b16 %v183
    %v264 = vunpack.c.h.b16 %v183
    %v265 = vunpack.c.l.b16 %v184
    %v266 = vunpack.c.h.b16 %v184
    %v267 = vunpack.c.l.b16 %v185
    %v268 = vunpack.c.h.b16 %v185
    %v269 = vunpack.c.l.b16 %v186
    %v270 = vunpack.c.h.b16 %v186
    %v271 = vunpack.c.l.b16 %v187
    %v272 = vunpack.c.h.b16 %v187
    %v273 = vunpack.c.l.b16 %v188
    %v274 = vunpack.c.h.b16 %v188
    %v275 = vunpack.c.l.b16 %v189
    %v276 = vunpack.c.h.b16 %v189
    %v277 = vunpack.c.l.b16 %v190
    %v278 = vunpack.c.h.b16 %v190
    %v279 = vunpack.c.l.b16 %v191
    %v280 = vunpack.c.h.b16 %v191
    %v281 = vunpack.c.l.b16 %v192
    %v282 = vunpack.c.h.b16 %v192
    %v283 = vunpack.c.l.b16 %v193
    %v284 = vunpack.c.h.b16 %v193
    %v285 = vunpack.c.l.b16 %v194
    %v286 = vunpack.c.h.b16 %v194
    %v287 = vunpack.c.l.b16 %v195
    %v288 = vunpack.c.h.b16 %v195
    %v289 = vunpack.c.l.b16 %v196
    %v290 = vunpack.c.h.b16 %v196
    %v291 = vunpack.c.l.b16 %v197
    %v292 = vunpack.c.h.b16 %v197
    %v293 = vunpack.c.l.b16 %v198
    %v294 = vunpack.c.h.b16 %v198
    %v295 = vunpack.c.l.b16 %v199
    %v296 = vunpack.c.h.b16 %v199
    %v297 = vunpack.c.l.b16 %v200
    %v298 = vunpack.c.h.b16 %v200
    %v299 = vunpack.c.l.b16 %v201
    %v300 = vunpack.c.h.b16 %v201
    %v301 = vunpack.c.l.b16 %v202
    %v302 = vunpack.c.h.b16 %v202
    %v303 = vunpack.c.l.b16 %v203
    %v304 = vunpack.c.h.b16 %v203
    %v305 = vunpack.c.l.b16 %v204
    %v306 = vunpack.c.h.b16 %v204
    %v307 = vunpack.c.l.b16 %v205
    %v308 = vunpack.c.h.b16 %v205
    %v309 = vunpack.c.l.b16 %v206
    %v310 = vunpack.c.h.b16 %v206
    %v311 = vunpack.c.l.b16 %v207
    %v312 = vunpack.c.h.b16 %v207
    %v313 = vunpack.c.l.b16 %v208
    %v314 = vunpack.c.h.b16 %v208
    %v315 = vunpack.c.l.b16 %v209
    %v316 = vunpack.c.h.b16 %v209
    %v317 = vunpack.c.l.b16 %v210
    %v318 = vunpack.c.h.b16 %v210
    %v319 = vpack.c.b16 %v257, %v255
    %v320 = vpack.c.b16 %v258, %v256
    %v321 = vpack.c.b16 %v261, %v259
    %v322 = vpack.c.b16 %v262, %v260
    %v323 = vpack.c.b16 %v265, %v263
    %v324 = vpack.c.b16 %v266, %v264
    %v325 = vpack.c.b16 %v269, %v267
    %v326 = vpack.c.b16 %v270, %v268
    %v327 = vpack.c.b16 %v273, %v271
    %v328 = vpack.c.b16 %v274, %v272
    %v329 = vpack.c.b16 %v277, %v275
    %v330 = vpack.c.b16 %v278, %v276
    %v331 = vpack.c.b16 %v281, %v279
    %v332 = vpack.c.b16 %v282, %v280
    %v333 = vpack.c.b16 %v285, %v283
    %v334 = vpack.c.b16 %v286, %v284
    %v335 = vpack.c.b16 %v289, %v287
    %v336 = vpack.c.b16 %v290, %v288
    %v337 = vpack.c.b16 %v293, %v291
    %v338 = vpack.c.b16 %v294, %v292
    %v339 = vpack.c.b16 %v297, %v295
    %v340 = vpack.c.b16 %v298, %v296
    %v341 = vpack.c.b16 %v301, %v299
    %v342 = vpack.c.b16 %v302, %v300
    %v343 = vpack.c.b16 %v305, %v303
    %v344 = vpack.c.b16 %v306, %v304
    %v345 = vpack.c.b16 %v309, %v307
    %v346 = vpack.c.b16 %v310, %v308
    %v347 = vpack.c.b16 %v313, %v311
    %v348 = vpack.c.b16 %v314, %v312
    %v349 = vpack.c.b16 %v317, %v315
    %v350 = vpack.c.b16 %v318, %v316
    %383 = vmatprep.subr.bf16.mxu0 %v320
    %384 = vmatpush1.bf16.msra.mxu0 %v319
    %385 = vmatprep.subr.bf16.mxu0 %v322
    %386 = vmatpush1.bf16.msra.mxu0 %v321
    %387 = vmatprep.subr.bf16.mxu0 %v324
    %388 = vmatpush1.bf16.msra.mxu0 %v323
    %389 = vmatprep.subr.bf16.mxu0 %v326
    %390 = vmatpush1.bf16.msra.mxu0 %v325
    %391 = vmatprep.subr.bf16.mxu0 %v328
    %392 = vmatpush1.bf16.msra.mxu0 %v327
    %393 = vmatprep.subr.bf16.mxu0 %v330
    %394 = vmatpush1.bf16.msra.mxu0 %v329
    %395 = vmatprep.subr.bf16.mxu0 %v332
    %396 = vmatpush1.bf16.msra.mxu0 %v331
    %397 = vmatprep.subr.bf16.mxu0 %v334
    %398 = vmatpush1.bf16.msra.mxu0 %v333
    %399 = vmatprep.subr.bf16.mxu0 %v336
    %400 = vmatpush1.bf16.msra.mxu0 %v335
    %401 = vmatprep.subr.bf16.mxu0 %v338
    %402 = vmatpush1.bf16.msra.mxu0 %v337
    %403 = vmatprep.subr.bf16.mxu0 %v340
    %404 = vmatpush1.bf16.msra.mxu0 %v339
    %405 = vmatprep.subr.bf16.mxu0 %v342
    %406 = vmatpush1.bf16.msra.mxu0 %v341
    %407 = vmatprep.subr.bf16.mxu0 %v344
    %408 = vmatpush1.bf16.msra.mxu0 %v343
    %409 = vmatprep.subr.bf16.mxu0 %v346
    %410 = vmatpush1.bf16.msra.mxu0 %v345
    %411 = vmatprep.subr.bf16.mxu0 %v348
    %412 = vmatpush1.bf16.msra.mxu0 %v347
    %413 = vmatprep.subr.bf16.mxu0 %v350
    %414 = vmatpush1.bf16.msra.mxu0 %v349
    %415 = vmatprep.mubr.bf16.mxu0 %v142
    %416 = vmatmul.mubr.bf16.gmra.mrb[0].mxu0 %v141
    %v417 = vpop.f32.mrb[0].mxu0
    %v418 = vadd.f32 %v216, %v417
    %v419 = vpop.f32.mrb[0].mxu0
    %v420 = vadd.f32 %v220, %v419
    %v421 = vpop.f32.mrb[0].mxu0
    %v422 = vadd.f32 %v216, %v421
    %v423 = vpop.f32.mrb[0].mxu0
    %v424 = vadd.f32 %v220, %v423
    %425 = vmatprep.mubr.bf16.mxu0 %v144
    %426 = vmatmul.mubr.bf16.gmra.mrb[0].mxu0 %v143
    %v427 = vpop.f32.mrb[0].mxu0
    %v428 = vadd.f32 %v216, %v427
    %v429 = vpop.f32.mrb[0].mxu0
    %v430 = vadd.f32 %v220, %v429
    %v431 = vpop.f32.mrb[0].mxu0
    %v432 = vadd.f32 %v216, %v431
    %v433 = vpop.f32.mrb[0].mxu0
    %v434 = vadd.f32 %v220, %v433
    %435 = vmatprep.mubr.bf16.mxu0 %v146
    %436 = vmatmul.mubr.bf16.gmra.mrb[0].mxu0 %v145
    %v437 = vpop.f32.mrb[0].mxu0
    %v438 = vadd.f32 %v216, %v437
    %v439 = vpop.f32.mrb[0].mxu0
    %v440 = vadd.f32 %v220, %v439
    %v441 = vpop.f32.mrb[0].mxu0
    %v442 = vadd.f32 %v216, %v441
    %v443 = vpop.f32.mrb[0].mxu0
    %v444 = vadd.f32 %v220, %v443
    %445 = vmatprep.mubr.bf16.mxu0 %v148
    %446 = vmatmul.mubr.bf16.gmra.mrb[0].mxu0 %v147
    %v447 = vpop.f32.mrb[0].mxu0
    %v448 = vadd.f32 %v216, %v447
    %v449 = vpop.f32.mrb[0].mxu0
    %v450 = vadd.f32 %v220, %v449
    %v451 = vpop.f32.mrb[0].mxu0
    %v452 = vadd.f32 %v216, %v451
    %v453 = vpop.f32.mrb[0].mxu0
    %v454 = vadd.f32 %v220, %v453
    %455 = vmatprep.mubr.bf16.mxu0 %v150
    %456 = vmatmul.mubr.bf16.gmra.mrb[0].mxu0 %v149
    %v457 = vpop.f32.mrb[0].mxu0
    %v458 = vadd.f32 %v216, %v457
    %v459 = vpop.f32.mrb[0].mxu0
    %v460 = vadd.f32 %v220, %v459
    %v461 = vpop.f32.mrb[0].mxu0
    %v462 = vadd.f32 %v216, %v461
    %v463 = vpop.f32.mrb[0].mxu0
    %v464 = vadd.f32 %v220, %v463
    %465 = vmatprep.mubr.bf16.mxu0 %v152
    %466 = vmatmul.mubr.bf16.gmra.mrb[0].mxu0 %v151
    %v467 = vpop.f32.mrb[0].mxu0
    %v468 = vadd.f32 %v216, %v467
    %v469 = vpop.f32.mrb[0].mxu0
    %v470 = vadd.f32 %v220, %v469
    %v471 = vpop.f32.mrb[0].mxu0
    %v472 = vadd.f32 %v216, %v471
    %v473 = vpop.f32.mrb[0].mxu0
    %v474 = vadd.f32 %v220, %v473
    %475 = vmatprep.mubr.bf16.mxu0 %v154
    %476 = vmatmul.mubr.bf16.gmra.mrb[0].mxu0 %v153
    %v477 = vpop.f32.mrb[0].mxu0
    %v478 = vadd.f32 %v216, %v477
    %v479 = vpop.f32.mrb[0].mxu0
    %v480 = vadd.f32 %v220, %v479
    %v481 = vpop.f32.mrb[0].mxu0
    %v482 = vadd.f32 %v216, %v481
    %v483 = vpop.f32.mrb[0].mxu0
    %v484 = vadd.f32 %v220, %v483
    %485 = vmatprep.mubr.bf16.mxu0 %v156
    %486 = vmatmul.mubr.bf16.gmra.mrb[0].mxu0 %v155
    %v487 = vpop.f32.mrb[0].mxu0
    %v488 = vadd.f32 %v216, %v487
    %v489 = vpop.f32.mrb[0].mxu0
    %v490 = vadd.f32 %v220, %v489
    %v491 = vpop.f32.mrb[0].mxu0
    %v492 = vadd.f32 %v216, %v491
    %v493 = vpop.f32.mrb[0].mxu0
    %v494 = vadd.f32 %v220, %v493
    %495 = vmatprep.mubr.bf16.mxu0 %v158
    %496 = vmatmul.mubr.bf16.gmra.mrb[0].mxu0 %v157
    %v497 = vpop.f32.mrb[0].mxu0
    %v498 = vadd.f32 %v216, %v497
    %v499 = vpop.f32.mrb[0].mxu0
    %v500 = vadd.f32 %v220, %v499
    %v501 = vpop.f32.mrb[0].mxu0
    %v502 = vadd.f32 %v216, %v501
    %v503 = vpop.f32.mrb[0].mxu0
    %v504 = vadd.f32 %v220, %v503
    %505 = vmatprep.mubr.bf16.mxu0 %v160
    %506 = vmatmul.mubr.bf16.gmra.mrb[0].mxu0 %v159
    %v507 = vpop.f32.mrb[0].mxu0
    %v508 = vadd.f32 %v216, %v507
    %v509 = vpop.f32.mrb[0].mxu0
    %v510 = vadd.f32 %v220, %v509
    %v511 = vpop.f32.mrb[0].mxu0
    %v512 = vadd.f32 %v216, %v511
    %v513 = vpop.f32.mrb[0].mxu0
    %v514 = vadd.f32 %v220, %v513
    %515 = vmatprep.mubr.bf16.mxu0 %v162
    %516 = vmatmul.mubr.bf16.gmra.mrb[0].mxu0 %v161
    %v517 = vpop.f32.mrb[0].mxu0
    %v518 = vadd.f32 %v216, %v517
    %v519 = vpop.f32.mrb[0].mxu0
    %v520 = vadd.f32 %v220, %v519
    %v521 = vpop.f32.mrb[0].mxu0
    %v522 = vadd.f32 %v216, %v521
    %v523 = vpop.f32.mrb[0].mxu0
    %v524 = vadd.f32 %v220, %v523
    %525 = vmatprep.mubr.bf16.mxu0 %v164
    %526 = vmatmul.mubr.bf16.gmra.mrb[0].mxu0 %v163
    %v527 = vpop.f32.mrb[0].mxu0
    %v528 = vadd.f32 %v216, %v527
    %v529 = vpop.f32.mrb[0].mxu0
    %v530 = vadd.f32 %v220, %v529
    %v531 = vpop.f32.mrb[0].mxu0
    %v532 = vadd.f32 %v216, %v531
    %v533 = vpop.f32.mrb[0].mxu0
    %v534 = vadd.f32 %v220, %v533
    %535 = vmatprep.mubr.bf16.mxu0 %v166
    %536 = vmatmul.mubr.bf16.gmra.mrb[0].mxu0 %v165
    %v537 = vpop.f32.mrb[0].mxu0
    %v538 = vadd.f32 %v216, %v537
    %v539 = vpop.f32.mrb[0].mxu0
    %v540 = vadd.f32 %v220, %v539
    %v541 = vpop.f32.mrb[0].mxu0
    %v542 = vadd.f32 %v216, %v541
    %v543 = vpop.f32.mrb[0].mxu0
    %v544 = vadd.f32 %v220, %v543
    %545 = vmatprep.mubr.bf16.mxu0 %v168
    %546 = vmatmul.mubr.bf16.gmra.mrb[0].mxu0 %v167
    %v547 = vpop.f32.mrb[0].mxu0
    %v548 = vadd.f32 %v216, %v547
    %v549 = vpop.f32.mrb[0].mxu0
    %v550 = vadd.f32 %v220, %v549
    %v551 = vpop.f32.mrb[0].mxu0
    %v552 = vadd.f32 %v216, %v551
    %v553 = vpop.f32.mrb[0].mxu0
    %v554 = vadd.f32 %v220, %v553
    %555 = vmatprep.mubr.bf16.mxu0 %v170
    %556 = vmatmul.mubr.bf16.gmra.mrb[0].mxu0 %v169
    %v557 = vpop.f32.mrb[0].mxu0
    %v558 = vadd.f32 %v216, %v557
    %v559 = vpop.f32.mrb[0].mxu0
    %v560 = vadd.f32 %v220, %v559
    %v561 = vpop.f32.mrb[0].mxu0
    %v562 = vadd.f32 %v216, %v561
    %v563 = vpop.f32.mrb[0].mxu0
    %v564 = vadd.f32 %v220, %v563
    %565 = vmatprep.mubr.bf16.mxu0 %v172
    %566 = vmatmul.mubr.bf16.gmra.mrb[0].mxu0 %v171
    %v567 = vpop.f32.mrb[0].mxu0
    %v568 = vadd.f32 %v216, %v567
    %v569 = vpop.f32.mrb[0].mxu0
    %v570 = vadd.f32 %v220, %v569
    %v571 = vpop.f32.mrb[0].mxu0
    %v572 = vadd.f32 %v216, %v571
    %v573 = vpop.f32.mrb[0].mxu0
    %v574 = vadd.f32 %v220, %v573
    %575 = vmatprep.mubr.bf16.mxu0 %v174
    %576 = vmatmul.mubr.bf16.gmra.mrb[0].mxu0 %v173
    %v577 = vpop.f32.mrb[0].mxu0
    %v578 = vadd.f32 %v216, %v577
    %v579 = vpop.f32.mrb[0].mxu0
    %v580 = vadd.f32 %v220, %v579
    %v581 = vpop.f32.mrb[0].mxu0
    %v582 = vadd.f32 %v216, %v581
    %v583 = vpop.f32.mrb[0].mxu0
    %v584 = vadd.f32 %v220, %v583
    %585 = vmatprep.mubr.bf16.mxu0 %v176
    %586 = vmatmul.mubr.bf16.gmra.mrb[0].mxu0 %v175
    %v587 = vpop.f32.mrb[0].mxu0
    %v588 = vadd.f32 %v216, %v587
    %v589 = vpop.f32.mrb[0].mxu0
    %v590 = vadd.f32 %v220, %v589
    %v591 = vpop.f32.mrb[0].mxu0
    %v592 = vadd.f32 %v216, %v591
    %v593 = vpop.f32.mrb[0].mxu0
    %v594 = vadd.f32 %v220, %v593
    %595 = vmatprep.mubr.bf16.mxu0 %v178
    %596 = vmatmul.mubr.bf16.gmra.mrb[0].mxu0 %v177
    %v597 = vpop.f32.mrb[0].mxu0
    %v598 = vadd.f32 %v216, %v597
    %v599 = vpop.f32.mrb[0].mxu0
    %v600 = vadd.f32 %v220, %v599
    %v601 = vpop.f32.mrb[0].mxu0
    %v602 = vadd.f32 %v216, %v601
    %v603 = vpop.f32.mrb[0].mxu0
    %v604 = vadd.f32 %v220, %v603
    %605 = vdwg.mxu0
    %v606 = vmax.f32 %v418, 0.0
    %v607 = vmax.f32 %v420, 0.0
    %v608 = vmax.f32 %v422, 0.0
    %v609 = vmax.f32 %v424, 0.0
    %v610 = vmax.f32 %v428, 0.0
    %v611 = vmax.f32 %v430, 0.0
    %v612 = vmax.f32 %v432, 0.0
    %v613 = vmax.f32 %v434, 0.0
    %v614 = vmax.f32 %v438, 0.0
    %v615 = vmax.f32 %v440, 0.0
    %v616 = vmax.f32 %v442, 0.0
    %v617 = vmax.f32 %v444, 0.0
    %v618 = vmax.f32 %v448, 0.0
    %v619 = vmax.f32 %v450, 0.0
    %v620 = vmax.f32 %v452, 0.0
    %v621 = vmax.f32 %v454, 0.0
    %v622 = vmax.f32 %v458, 0.0
    %v623 = vmax.f32 %v460, 0.0
    %v624 = vmax.f32 %v462, 0.0
    %v625 = vmax.f32 %v464, 0.0
    %v626 = vmax.f32 %v468, 0.0
    %v627 = vmax.f32 %v470, 0.0
    %v628 = vmax.f32 %v472, 0.0
    %v629 = vmax.f32 %v474, 0.0
    %v630 = vmax.f32 %v478, 0.0
    %v631 = vmax.f32 %v480, 0.0
    %v632 = vmax.f32 %v482, 0.0
    %v633 = vmax.f32 %v484, 0.0
    %v634 = vmax.f32 %v488, 0.0
    %v635 = vmax.f32 %v490, 0.0
    %v636 = vmax.f32 %v492, 0.0
    %v637 = vmax.f32 %v494, 0.0
    %v638 = vmax.f32 %v498, 0.0
    %v639 = vmax.f32 %v500, 0.0
    %v640 = vmax.f32 %v502, 0.0
    %v641 = vmax.f32 %v504, 0.0
    %v642 = vmax.f32 %v508, 0.0
    %v643 = vmax.f32 %v510, 0.0
    %v644 = vmax.f32 %v512, 0.0
    %v645 = vmax.f32 %v514, 0.0
    %v646 = vmax.f32 %v518, 0.0
    %v647 = vmax.f32 %v520, 0.0
    %v648 = vmax.f32 %v522, 0.0
    %v649 = vmax.f32 %v524, 0.0
    %v650 = vmax.f32 %v528, 0.0
    %v651 = vmax.f32 %v530, 0.0
    %v652 = vmax.f32 %v532, 0.0
    %v653 = vmax.f32 %v534, 0.0
    %v654 = vmax.f32 %v538, 0.0
    %v655 = vmax.f32 %v540, 0.0
    %v656 = vmax.f32 %v542, 0.0
    %v657 = vmax.f32 %v544, 0.0
    %v658 = vmax.f32 %v548, 0.0
    %v659 = vmax.f32 %v550, 0.0
    %v660 = vmax.f32 %v552, 0.0
    %v661 = vmax.f32 %v554, 0.0
    %v662 = vmax.f32 %v558, 0.0
    %v663 = vmax.f32 %v560, 0.0
    %v664 = vmax.f32 %v562, 0.0
    %v665 = vmax.f32 %v564, 0.0
    %v666 = vmax.f32 %v568, 0.0
    %v667 = vmax.f32 %v570, 0.0
    %v668 = vmax.f32 %v572, 0.0
    %v669 = vmax.f32 %v574, 0.0
    %v670 = vmax.f32 %v578, 0.0
    %v671 = vmax.f32 %v580, 0.0
    %v672 = vmax.f32 %v582, 0.0
    %v673 = vmax.f32 %v584, 0.0
    %v674 = vmax.f32 %v588, 0.0
    %v675 = vmax.f32 %v590, 0.0
    %v676 = vmax.f32 %v592, 0.0
    %v677 = vmax.f32 %v594, 0.0
    %v678 = vmax.f32 %v598, 0.0
    %v679 = vmax.f32 %v600, 0.0
    %v680 = vmax.f32 %v602, 0.0
    %v681 = vmax.f32 %v604, 0.0
    %v682 = vpack.c.bf16 %v608, %v606
    %v683 = vpack.c.bf16 %v609, %v607
    %v684 = vpack.c.bf16 %v612, %v610
    %v685 = vpack.c.bf16 %v613, %v611
    %v686 = vpack.c.bf16 %v616, %v614
    %v687 = vpack.c.bf16 %v617, %v615
    %v688 = vpack.c.bf16 %v620, %v618
    %v689 = vpack.c.bf16 %v621, %v619
    %v690 = vpack.c.bf16 %v624, %v622
    %v691 = vpack.c.bf16 %v625, %v623
    %v692 = vpack.c.bf16 %v628, %v626
    %v693 = vpack.c.bf16 %v629, %v627
    %v694 = vpack.c.bf16 %v632, %v630
    %v695 = vpack.c.bf16 %v633, %v631
    %v696 = vpack.c.bf16 %v636, %v634
    %v697 = vpack.c.bf16 %v637, %v635
    %v698 = vpack.c.bf16 %v640, %v638
    %v699 = vpack.c.bf16 %v641, %v639
    %v700 = vpack.c.bf16 %v644, %v642
    %v701 = vpack.c.bf16 %v645, %v643
    %v702 = vpack.c.bf16 %v648, %v646
    %v703 = vpack.c.bf16 %v649, %v647
    %v704 = vpack.c.bf16 %v652, %v650
    %v705 = vpack.c.bf16 %v653, %v651
    %v706 = vpack.c.bf16 %v656, %v654
    %v707 = vpack.c.bf16 %v657, %v655
    %v708 = vpack.c.bf16 %v660, %v658
    %v709 = vpack.c.bf16 %v661, %v659
    %v710 = vpack.c.bf16 %v664, %v662
    %v711 = vpack.c.bf16 %v665, %v663
    %v712 = vpack.c.bf16 %v668, %v666
    %v713 = vpack.c.bf16 %v669, %v667
    %v714 = vpack.c.bf16 %v672, %v670
    %v715 = vpack.c.bf16 %v673, %v671
    %v716 = vpack.c.bf16 %v676, %v674
    %v717 = vpack.c.bf16 %v677, %v675
    %v718 = vpack.c.bf16 %v680, %v678
    %v719 = vpack.c.bf16 %v681, %v679
    %v758 = vunpack.c.l.b16 %v682
    %v759 = vunpack.c.l.b16 %v683
    %v760 = vunpack.c.h.b16 %v682
    %v761 = vunpack.c.h.b16 %v683
    %v762 = vunpack.c.l.b16 %v684
    %v763 = vunpack.c.l.b16 %v685
    %v764 = vunpack.c.h.b16 %v684
    %v765 = vunpack.c.h.b16 %v685
    %v766 = vunpack.c.l.b16 %v686
    %v767 = vunpack.c.l.b16 %v687
    %v768 = vunpack.c.h.b16 %v686
    %v769 = vunpack.c.h.b16 %v687
    %v770 = vunpack.c.l.b16 %v688
    %v771 = vunpack.c.l.b16 %v689
    %v772 = vunpack.c.h.b16 %v688
    %v773 = vunpack.c.h.b16 %v689
    %v774 = vunpack.c.l.b16 %v690
    %v775 = vunpack.c.l.b16 %v691
    %v776 = vunpack.c.h.b16 %v690
    %v777 = vunpack.c.h.b16 %v691
    %v778 = vunpack.c.l.b16 %v692
    %v779 = vunpack.c.l.b16 %v693
    %v780 = vunpack.c.h.b16 %v692
    %v781 = vunpack.c.h.b16 %v693
    %v782 = vunpack.c.l.b16 %v694
    %v783 = vunpack.c.l.b16 %v695
    %v784 = vunpack.c.h.b16 %v694
    %v785 = vunpack.c.h.b16 %v695
    %v786 = vunpack.c.l.b16 %v696
    %v787 = vunpack.c.l.b16 %v697
    %v788 = vunpack.c.h.b16 %v696
    %v789 = vunpack.c.h.b16 %v697
    %v790 = vunpack.c.l.b16 %v698
    %v791 = vunpack.c.l.b16 %v699
    %v792 = vunpack.c.h.b16 %v698
    %v793 = vunpack.c.h.b16 %v699
    %v794 = vunpack.c.l.b16 %v700
    %v795 = vunpack.c.l.b16 %v701
    %v796 = vunpack.c.h.b16 %v700
    %v797 = vunpack.c.h.b16 %v701
    %v798 = vunpack.c.l.b16 %v702
    %v799 = vunpack.c.l.b16 %v703
    %v800 = vunpack.c.h.b16 %v702
    %v801 = vunpack.c.h.b16 %v703
    %v802 = vunpack.c.l.b16 %v704
    %v803 = vunpack.c.l.b16 %v705
    %v804 = vunpack.c.h.b16 %v704
    %v805 = vunpack.c.h.b16 %v705
    %v806 = vunpack.c.l.b16 %v706
    %v807 = vunpack.c.l.b16 %v707
    %v808 = vunpack.c.h.b16 %v706
    %v809 = vunpack.c.h.b16 %v707
    %v810 = vunpack.c.l.b16 %v708
    %v811 = vunpack.c.l.b16 %v709
    %v812 = vunpack.c.h.b16 %v708
    %v813 = vunpack.c.h.b16 %v709
    %v814 = vunpack.c.l.b16 %v710
    %v815 = vunpack.c.l.b16 %v711
    %v816 = vunpack.c.h.b16 %v710
    %v817 = vunpack.c.h.b16 %v711
    %v818 = vunpack.c.l.b16 %v712
    %v819 = vunpack.c.l.b16 %v713
    %v820 = vunpack.c.h.b16 %v712
    %v821 = vunpack.c.h.b16 %v713
    %v822 = vunpack.c.l.b16 %v714
    %v823 = vunpack.c.l.b16 %v715
    %v824 = vunpack.c.h.b16 %v714
    %v825 = vunpack.c.h.b16 %v715
    %v826 = vunpack.c.l.b16 %v716
    %v827 = vunpack.c.l.b16 %v717
    %v828 = vunpack.c.h.b16 %v716
    %v829 = vunpack.c.h.b16 %v717
    %v830 = vunpack.c.l.b16 %v718
    %v831 = vunpack.c.l.b16 %v719
    %v832 = vunpack.c.h.b16 %v718
    %v833 = vunpack.c.h.b16 %v719
    %v834 = vpack.c.b16 %v759, %v758
    %v835 = vpack.c.b16 %v761, %v760
    %v836 = vpack.c.b16 %v763, %v762
    %v837 = vpack.c.b16 %v765, %v764
    %v838 = vpack.c.b16 %v767, %v766
    %v839 = vpack.c.b16 %v769, %v768
    %v840 = vpack.c.b16 %v771, %v770
    %v841 = vpack.c.b16 %v773, %v772
    %v842 = vpack.c.b16 %v775, %v774
    %v843 = vpack.c.b16 %v777, %v776
    %v844 = vpack.c.b16 %v779, %v778
    %v845 = vpack.c.b16 %v781, %v780
    %v846 = vpack.c.b16 %v783, %v782
    %v847 = vpack.c.b16 %v785, %v784
    %v848 = vpack.c.b16 %v787, %v786
    %v849 = vpack.c.b16 %v789, %v788
    %v850 = vpack.c.b16 %v791, %v790
    %v851 = vpack.c.b16 %v793, %v792
    %v852 = vpack.c.b16 %v795, %v794
    %v853 = vpack.c.b16 %v797, %v796
    %v854 = vpack.c.b16 %v799, %v798
    %v855 = vpack.c.b16 %v801, %v800
    %v856 = vpack.c.b16 %v803, %v802
    %v857 = vpack.c.b16 %v805, %v804
    %v858 = vpack.c.b16 %v807, %v806
    %v859 = vpack.c.b16 %v809, %v808
    %v860 = vpack.c.b16 %v811, %v810
    %v861 = vpack.c.b16 %v813, %v812
    %v862 = vpack.c.b16 %v815, %v814
    %v863 = vpack.c.b16 %v817, %v816
    %v864 = vpack.c.b16 %v819, %v818
    %v865 = vpack.c.b16 %v821, %v820
    %v866 = vpack.c.b16 %v823, %v822
    %v867 = vpack.c.b16 %v825, %v824
    %v868 = vpack.c.b16 %v827, %v826
    %v869 = vpack.c.b16 %v829, %v828
    %v870 = vpack.c.b16 %v831, %v830
    %v871 = vpack.c.b16 %v833, %v832
    %910 = vst [vmem:[#allocation10] sm:$0xff] %v834
    %911 = vst [vmem:[#allocation10 + $0x8] sm:$0xff] %v835
    %912 = vst [vmem:[#allocation10 + $0x10] sm:$0xff] %v836
    %913 = vst [vmem:[#allocation10 + $0x18] sm:$0xff] %v837
    %914 = vst [vmem:[#allocation10 + $0x20] sm:$0xff] %v838
    %915 = vst [vmem:[#allocation10 + $0x28] sm:$0xff] %v839
    %916 = vst [vmem:[#allocation10 + $0x30] sm:$0xff] %v840
    %917 = vst [vmem:[#allocation10 + $0x38] sm:$0xff] %v841
    %918 = vst [vmem:[#allocation10 + $0x40] sm:$0xff] %v842
    %919 = vst [vmem:[#allocation10 + $0x48] sm:$0xff] %v843
    %920 = vst [vmem:[#allocation10 + $0x50] sm:$0xff] %v844
    %921 = vst [vmem:[#allocation10 + $0x58] sm:$0xff] %v845
    %922 = vst [vmem:[#allocation10 + $0x60] sm:$0xff] %v846
    %923 = vst [vmem:[#allocation10 + $0x68] sm:$0xff] %v847
    %924 = vst [vmem:[#allocation10 + $0x70] sm:$0xff] %v848
    %925 = vst [vmem:[#allocation10 + $0x78] sm:$0xff] %v849
    %926 = vst [vmem:[#allocation10 + $0x80] sm:$0xff] %v850
    %927 = vst [vmem:[#allocation10 + $0x88] sm:$0xff] %v851
    %928 = vst [vmem:[#allocation10 + $0x90] sm:$0xff] %v852
    %929 = vst [vmem:[#allocation10 + $0x98] sm:$0xff] %v853
    %930 = vst [vmem:[#allocation10 + $0xa0] sm:$0xff] %v854
    %931 = vst [vmem:[#allocation10 + $0xa8] sm:$0xff] %v855
    %932 = vst [vmem:[#allocation10 + $0xb0] sm:$0xff] %v856
    %933 = vst [vmem:[#allocation10 + $0xb8] sm:$0xff] %v857
    %934 = vst [vmem:[#allocation10 + $0xc0] sm:$0xff] %v858
    %935 = vst [vmem:[#allocation10 + $0xc8] sm:$0xff] %v859
    %936 = vst [vmem:[#allocation10 + $0xd0] sm:$0xff] %v860
    %937 = vst [vmem:[#allocation10 + $0xd8] sm:$0xff] %v861
    %938 = vst [vmem:[#allocation10 + $0xe0] sm:$0xff] %v862
    %939 = vst [vmem:[#allocation10 + $0xe8] sm:$0xff] %v863
    %940 = vst [vmem:[#allocation10 + $0xf0] sm:$0xff] %v864
    %941 = vst [vmem:[#allocation10 + $0xf8] sm:$0xff] %v865
    %942 = vst [vmem:[#allocation10 + $0x100] sm:$0xff] %v866
    %943 = vst [vmem:[#allocation10 + $0x108] sm:$0xff] %v867
    %944 = vst [vmem:[#allocation10 + $0x110] sm:$0xff] %v868
    %945 = vst [vmem:[#allocation10 + $0x118] sm:$0xff] %v869
    %946 = vst [vmem:[#allocation10 + $0x120] sm:$0xff] %v870
    %947 = vst [vmem:[#allocation10 + $0x128] sm:$0x33] %v871
    %p948 = scmp.eq.s32.totalorder 0, 0
    // Predicated region
    $region34: #{tpu_custom_call.1} parent=1 // pred_check
      %p949 = pneg %p948
    $region35: #{tpu_custom_call.1} parent=1 // pred_check_branch
      %951 = sbr.rel (%p949) target = $region37
    $region36: #{tpu_custom_call.1} parent=1 // pred_region
      %952 = vst [vmem:[#allocation2] sm:$0xff] 0.0
      %953 = vst [vmem:[#allocation2 + $0x8] sm:$0xff] 0.0
      %954 = vst [vmem:[#allocation2 + $0x10] sm:$0xff] 0.0
      %955 = vst [vmem:[#allocation2 + $0x18] sm:$0xff] 0.0
      %956 = vst [vmem:[#allocation2 + $0x20] sm:$0xff] 0.0
      %957 = vst [vmem:[#allocation2 + $0x28] sm:$0xff] 0.0
      %958 = vst [vmem:[#allocation2 + $0x30] sm:$0xff] 0.0
      %959 = vst [vmem:[#allocation2 + $0x38] sm:$0xff] 0.0
      %960 = vst [vmem:[#allocation2 + $0x40] sm:$0xff] 0.0
      %961 = vst [vmem:[#allocation2 + $0x48] sm:$0xff] 0.0
      %962 = vst [vmem:[#allocation2 + $0x50] sm:$0xff] 0.0
      %963 = vst [vmem:[#allocation2 + $0x58] sm:$0xff] 0.0
      %964 = vst [vmem:[#allocation2 + $0x60] sm:$0xff] 0.0
      %965 = vst [vmem:[#allocation2 + $0x68] sm:$0xff] 0.0
      %966 = vst [vmem:[#allocation2 + $0x70] sm:$0xff] 0.0
      %967 = vst [vmem:[#allocation2 + $0x78] sm:$0xff] 0.0
      %968 = vst [vmem:[#allocation2 + $0x80] sm:$0xff] 0.0
      %969 = vst [vmem:[#allocation2 + $0x88] sm:$0xff] 0.0
      %970 = vst [vmem:[#allocation2 + $0x90] sm:$0xff] 0.0
      %971 = vst [vmem:[#allocation2 + $0x98] sm:$0xff] 0.0
      %972 = vst [vmem:[#allocation2 + $0xa0] sm:$0xff] 0.0
      %973 = vst [vmem:[#allocation2 + $0xa8] sm:$0xff] 0.0
      %974 = vst [vmem:[#allocation2 + $0xb0] sm:$0xff] 0.0
      %975 = vst [vmem:[#allocation2 + $0xb8] sm:$0xff] 0.0
      %976 = vst [vmem:[#allocation2 + $0xc0] sm:$0xff] 0.0
      %977 = vst [vmem:[#allocation2 + $0xc8] sm:$0xff] 0.0
      %978 = vst [vmem:[#allocation2 + $0xd0] sm:$0xff] 0.0
      %979 = vst [vmem:[#allocation2 + $0xd8] sm:$0xff] 0.0
      %980 = vst [vmem:[#allocation2 + $0xe0] sm:$0xff] 0.0
      %981 = vst [vmem:[#allocation2 + $0xe8] sm:$0xff] 0.0
      %982 = vst [vmem:[#allocation2 + $0xf0] sm:$0xff] 0.0
      %983 = vst [vmem:[#allocation2 + $0xf8] sm:$0xff] 0.0
      %984 = vst [vmem:[#allocation2 + $0x100] sm:$0xff] 0.0
      %985 = vst [vmem:[#allocation2 + $0x108] sm:$0xff] 0.0
      %986 = vst [vmem:[#allocation2 + $0x110] sm:$0xff] 0.0
      %987 = vst [vmem:[#allocation2 + $0x118] sm:$0xff] 0.0
      %988 = vst [vmem:[#allocation2 + $0x120] sm:$0xff] 0.0
      %989 = vst [vmem:[#allocation2 + $0x128] sm:$0xff] 0.0
      %990 = vst [vmem:[#allocation2 + $0x130] sm:$0xff] 0.0
      %991 = vst [vmem:[#allocation2 + $0x138] sm:$0xff] 0.0
      %992 = vst [vmem:[#allocation2 + $0x140] sm:$0xff] 0.0
      %993 = vst [vmem:[#allocation2 + $0x148] sm:$0xff] 0.0
      %994 = vst [vmem:[#allocation2 + $0x150] sm:$0xff] 0.0
      %995 = vst [vmem:[#allocation2 + $0x158] sm:$0xff] 0.0
      %996 = vst [vmem:[#allocation2 + $0x160] sm:$0xff] 0.0
      %997 = vst [vmem:[#allocation2 + $0x168] sm:$0xff] 0.0
      %998 = vst [vmem:[#allocation2 + $0x170] sm:$0xff] 0.0
      %999 = vst [vmem:[#allocation2 + $0x178] sm:$0xff] 0.0
      %1000 = vst [vmem:[#allocation2 + $0x180] sm:$0xff] 0.0
      %1001 = vst [vmem:[#allocation2 + $0x188] sm:$0xff] 0.0
      %1002 = vst [vmem:[#allocation2 + $0x190] sm:$0xff] 0.0
      %1003 = vst [vmem:[#allocation2 + $0x198] sm:$0xff] 0.0
      %1004 = vst [vmem:[#allocation2 + $0x1a0] sm:$0xff] 0.0
      %1005 = vst [vmem:[#allocation2 + $0x1a8] sm:$0xff] 0.0
      %1006 = vst [vmem:[#allocation2 + $0x1b0] sm:$0xff] 0.0
      %1007 = vst [vmem:[#allocation2 + $0x1b8] sm:$0xff] 0.0
      %1008 = vst [vmem:[#allocation2 + $0x1c0] sm:$0xff] 0.0
      %1009 = vst [vmem:[#allocation2 + $0x1c8] sm:$0xff] 0.0
      %1010 = vst [vmem:[#allocation2 + $0x1d0] sm:$0xff] 0.0
      %1011 = vst [vmem:[#allocation2 + $0x1d8] sm:$0xff] 0.0
      %1012 = vst [vmem:[#allocation2 + $0x1e0] sm:$0xff] 0.0
      %1013 = vst [vmem:[#allocation2 + $0x1e8] sm:$0xff] 0.0
      %1014 = vst [vmem:[#allocation2 + $0x1f0] sm:$0xff] 0.0
      %1015 = vst [vmem:[#allocation2 + $0x1f8] sm:$0xff] 0.0
      %1016 = vst [vmem:[#allocation2 + $0x200] sm:$0xff] 0.0
      %1017 = vst [vmem:[#allocation2 + $0x208] sm:$0xff] 0.0
      %1018 = vst [vmem:[#allocation2 + $0x210] sm:$0xff] 0.0
      %1019 = vst [vmem:[#allocation2 + $0x218] sm:$0xff] 0.0
      %1020 = vst [vmem:[#allocation2 + $0x220] sm:$0xff] 0.0
      %1021 = vst [vmem:[#allocation2 + $0x228] sm:$0xff] 0.0
      %1022 = vst [vmem:[#allocation2 + $0x230] sm:$0xff] 0.0
      %1023 = vst [vmem:[#allocation2 + $0x238] sm:$0xff] 0.0
      %1024 = vst [vmem:[#allocation2 + $0x240] sm:$0xff] 0.0
      %1025 = vst [vmem:[#allocation2 + $0x248] sm:$0xff] 0.0
      %1026 = vst [vmem:[#allocation2 + $0x250] sm:$0xf] 0.0
      %1027 = vst [vmem:[#allocation2 + $0x258] sm:$0xf] 0.0
    $region37: #{tpu_custom_call.1} parent=1 // pred_fallthru
      _
    %v1028 = vld [vmem:[#allocation2] sm:$0xff]
    %v1029 = vld [vmem:[#allocation2 + $0x8] sm:$0xff]
    %v1030 = vld [vmem:[#allocation2 + $0x10] sm:$0xff]
    %v1031 = vld [vmem:[#allocation2 + $0x18] sm:$0xff]
    %v1032 = vld [vmem:[#allocation2 + $0x20] sm:$0xff]
    %v1033 = vld [vmem:[#allocation2 + $0x28] sm:$0xff]
    %v1034 = vld [vmem:[#allocation2 + $0x30] sm:$0xff]
    %v1035 = vld [vmem:[#allocation2 + $0x38] sm:$0xff]
    %v1036 = vld [vmem:[#allocation2 + $0x40] sm:$0xff]
    %v1037 = vld [vmem:[#allocation2 + $0x48] sm:$0xff]
    %v1038 = vld [vmem:[#allocation2 + $0x50] sm:$0xff]
    %v1039 = vld [vmem:[#allocation2 + $0x58] sm:$0xff]
    %v1040 = vld [vmem:[#allocation2 + $0x60] sm:$0xff]
    %v1041 = vld [vmem:[#allocation2 + $0x68] sm:$0xff]
    %v1042 = vld [vmem:[#allocation2 + $0x70] sm:$0xff]
    %v1043 = vld [vmem:[#allocation2 + $0x78] sm:$0xff]
    %v1044 = vld [vmem:[#allocation2 + $0x80] sm:$0xff]
    %v1045 = vld [vmem:[#allocation2 + $0x88] sm:$0xff]
    %v1046 = vld [vmem:[#allocation2 + $0x90] sm:$0xff]
    %v1047 = vld [vmem:[#allocation2 + $0x98] sm:$0xff]
    %v1048 = vld [vmem:[#allocation2 + $0xa0] sm:$0xff]
    %v1049 = vld [vmem:[#allocation2 + $0xa8] sm:$0xff]
    %v1050 = vld [vmem:[#allocation2 + $0xb0] sm:$0xff]
    %v1051 = vld [vmem:[#allocation2 + $0xb8] sm:$0xff]
    %v1052 = vld [vmem:[#allocation2 + $0xc0] sm:$0xff]
    %v1053 = vld [vmem:[#allocation2 + $0xc8] sm:$0xff]
    %v1054 = vld [vmem:[#allocation2 + $0xd0] sm:$0xff]
    %v1055 = vld [vmem:[#allocation2 + $0xd8] sm:$0xff]
    %v1056 = vld [vmem:[#allocation2 + $0xe0] sm:$0xff]
    %v1057 = vld [vmem:[#allocation2 + $0xe8] sm:$0xff]
    %v1058 = vld [vmem:[#allocation2 + $0xf0] sm:$0xff]
    %v1059 = vld [vmem:[#allocation2 + $0xf8] sm:$0xff]
    %v1060 = vld [vmem:[#allocation2 + $0x100] sm:$0xff]
    %v1061 = vld [vmem:[#allocation2 + $0x108] sm:$0xff]
    %v1062 = vld [vmem:[#allocation2 + $0x110] sm:$0xff]
    %v1063 = vld [vmem:[#allocation2 + $0x118] sm:$0xff]
    %v1064 = vld [vmem:[#allocation2 + $0x120] sm:$0xff]
    %v1065 = vld [vmem:[#allocation2 + $0x128] sm:$0xff]
    %v1066 = vld [vmem:[#allocation2 + $0x130] sm:$0xff]
    %v1067 = vld [vmem:[#allocation2 + $0x138] sm:$0xff]
    %v1068 = vld [vmem:[#allocation2 + $0x140] sm:$0xff]
    %v1069 = vld [vmem:[#allocation2 + $0x148] sm:$0xff]
    %v1070 = vld [vmem:[#allocation2 + $0x150] sm:$0xff]
    %v1071 = vld [vmem:[#allocation2 + $0x158] sm:$0xff]
    %v1072 = vld [vmem:[#allocation2 + $0x160] sm:$0xff]
    %v1073 = vld [vmem:[#allocation2 + $0x168] sm:$0xff]
    %v1074 = vld [vmem:[#allocation2 + $0x170] sm:$0xff]
    %v1075 = vld [vmem:[#allocation2 + $0x178] sm:$0xff]
    %v1076 = vld [vmem:[#allocation2 + $0x180] sm:$0xff]
    %v1077 = vld [vmem:[#allocation2 + $0x188] sm:$0xff]
    %v1078 = vld [vmem:[#allocation2 + $0x190] sm:$0xff]
    %v1079 = vld [vmem:[#allocation2 + $0x198] sm:$0xff]
    %v1080 = vld [vmem:[#allocation2 + $0x1a0] sm:$0xff]
    %v1081 = vld [vmem:[#allocation2 + $0x1a8] sm:$0xff]
    %v1082 = vld [vmem:[#allocation2 + $0x1b0] sm:$0xff]
    %v1083 = vld [vmem:[#allocation2 + $0x1b8] sm:$0xff]
    %v1084 = vld [vmem:[#allocation2 + $0x1c0] sm:$0xff]
    %v1085 = vld [vmem:[#allocation2 + $0x1c8] sm:$0xff]
    %v1086 = vld [vmem:[#allocation2 + $0x1d0] sm:$0xff]
    %v1087 = vld [vmem:[#allocation2 + $0x1d8] sm:$0xff]
    %v1088 = vld [vmem:[#allocation2 + $0x1e0] sm:$0xff]
    %v1089 = vld [vmem:[#allocation2 + $0x1e8] sm:$0xff]
    %v1090 = vld [vmem:[#allocation2 + $0x1f0] sm:$0xff]
    %v1091 = vld [vmem:[#allocation2 + $0x1f8] sm:$0xff]
    %v1092 = vld [vmem:[#allocation2 + $0x200] sm:$0xff]
    %v1093 = vld [vmem:[#allocation2 + $0x208] sm:$0xff]
    %v1094 = vld [vmem:[#allocation2 + $0x210] sm:$0xff]
    %v1095 = vld [vmem:[#allocation2 + $0x218] sm:$0xff]
    %v1096 = vld [vmem:[#allocation2 + $0x220] sm:$0xff]
    %v1097 = vld [vmem:[#allocation2 + $0x228] sm:$0xff]
    %v1098 = vld [vmem:[#allocation2 + $0x230] sm:$0xff]
    %v1099 = vld [vmem:[#allocation2 + $0x238] sm:$0xff]
    %v1100 = vld [vmem:[#allocation2 + $0x240] sm:$0xff]
    %v1101 = vld [vmem:[#allocation2 + $0x248] sm:$0xff]
    %v1102 = vld [vmem:[#allocation2 + $0x250] sm:$0xf]
    %v1103 = vld [vmem:[#allocation2 + $0x258] sm:$0xf]
    %v1104 = vld [vmem:[#allocation8] sm:$0xff]
    %v1105 = vld [vmem:[#allocation8 + $0x8] sm:$0xff]
    %v1106 = vld [vmem:[#allocation8 + $0x10] sm:$0xff]
    %v1107 = vld [vmem:[#allocation8 + $0x18] sm:$0xff]
    %v1108 = vld [vmem:[#allocation8 + $0x20] sm:$0xff]
    %v1109 = vld [vmem:[#allocation8 + $0x28] sm:$0xff]
    %v1110 = vld [vmem:[#allocation8 + $0x30] sm:$0xff]
    %v1111 = vld [vmem:[#allocation8 + $0x38] sm:$0xff]
    %v1112 = vld [vmem:[#allocation8 + $0x40] sm:$0xff]
    %v1113 = vld [vmem:[#allocation8 + $0x48] sm:$0xff]
    %v1114 = vld [vmem:[#allocation8 + $0x50] sm:$0xff]
    %v1115 = vld [vmem:[#allocation8 + $0x58] sm:$0xff]
    %v1116 = vld [vmem:[#allocation8 + $0x60] sm:$0xff]
    %v1117 = vld [vmem:[#allocation8 + $0x68] sm:$0xff]
    %v1118 = vld [vmem:[#allocation8 + $0x70] sm:$0xff]
    %v1119 = vld [vmem:[#allocation8 + $0x78] sm:$0xff]
    %v1120 = vld [vmem:[#allocation8 + $0x80] sm:$0xff]
    %v1121 = vld [vmem:[#allocation8 + $0x88] sm:$0xff]
    %v1122 = vld [vmem:[#allocation8 + $0x90] sm:$0xff]
    %v1123 = vld [vmem:[#allocation8 + $0x98] sm:$0xff]
    %v1124 = vld [vmem:[#allocation8 + $0xa0] sm:$0xff]
    %v1125 = vld [vmem:[#allocation8 + $0xa8] sm:$0xff]
    %v1126 = vld [vmem:[#allocation8 + $0xb0] sm:$0xff]
    %v1127 = vld [vmem:[#allocation8 + $0xb8] sm:$0xff]
    %v1128 = vld [vmem:[#allocation8 + $0xc0] sm:$0xff]
    %v1129 = vld [vmem:[#allocation8 + $0xc8] sm:$0xff]
    %v1130 = vld [vmem:[#allocation8 + $0xd0] sm:$0xff]
    %v1131 = vld [vmem:[#allocation8 + $0xd8] sm:$0xff]
    %v1132 = vld [vmem:[#allocation8 + $0xe0] sm:$0xff]
    %v1133 = vld [vmem:[#allocation8 + $0xe8] sm:$0xff]
    %v1134 = vld [vmem:[#allocation8 + $0xf0] sm:$0xff]
    %v1135 = vld [vmem:[#allocation8 + $0xf8] sm:$0xff]
    %v1168 = vunpack.c.l.b16 %v1104
    %v1169 = vunpack.c.h.b16 %v1104
    %v1170 = vunpack.c.l.b16 %v1105
    %v1171 = vunpack.c.h.b16 %v1105
    %v1172 = vunpack.c.l.b16 %v1106
    %v1173 = vunpack.c.h.b16 %v1106
    %v1174 = vunpack.c.l.b16 %v1107
    %v1175 = vunpack.c.h.b16 %v1107
    %v1176 = vunpack.c.l.b16 %v1108
    %v1177 = vunpack.c.h.b16 %v1108
    %v1178 = vunpack.c.l.b16 %v1109
    %v1179 = vunpack.c.h.b16 %v1109
    %v1180 = vunpack.c.l.b16 %v1110
    %v1181 = vunpack.c.h.b16 %v1110
    %v1182 = vunpack.c.l.b16 %v1111
    %v1183 = vunpack.c.h.b16 %v1111
    %v1184 = vunpack.c.l.b16 %v1112
    %v1185 = vunpack.c.h.b16 %v1112
    %v1186 = vunpack.c.l.b16 %v1113
    %v1187 = vunpack.c.h.b16 %v1113
    %v1188 = vunpack.c.l.b16 %v1114
    %v1189 = vunpack.c.h.b16 %v1114
    %v1190 = vunpack.c.l.b16 %v1115
    %v1191 = vunpack.c.h.b16 %v1115
    %v1192 = vunpack.c.l.b16 %v1116
    %v1193 = vunpack.c.h.b16 %v1116
    %v1194 = vunpack.c.l.b16 %v1117
    %v1195 = vunpack.c.h.b16 %v1117
    %v1196 = vunpack.c.l.b16 %v1118
    %v1197 = vunpack.c.h.b16 %v1118
    %v1198 = vunpack.c.l.b16 %v1119
    %v1199 = vunpack.c.h.b16 %v1119
    %v1200 = vunpack.c.l.b16 %v1120
    %v1201 = vunpack.c.h.b16 %v1120
    %v1202 = vunpack.c.l.b16 %v1121
    %v1203 = vunpack.c.h.b16 %v1121
    %v1204 = vunpack.c.l.b16 %v1122
    %v1205 = vunpack.c.h.b16 %v1122
    %v1206 = vunpack.c.l.b16 %v1123
    %v1207 = vunpack.c.h.b16 %v1123
    %v1208 = vunpack.c.l.b16 %v1124
    %v1209 = vunpack.c.h.b16 %v1124
    %v1210 = vunpack.c.l.b16 %v1125
    %v1211 = vunpack.c.h.b16 %v1125
    %v1212 = vunpack.c.l.b16 %v1126
    %v1213 = vunpack.c.h.b16 %v1126
    %v1214 = vunpack.c.l.b16 %v1127
    %v1215 = vunpack.c.h.b16 %v1127
    %v1216 = vunpack.c.l.b16 %v1128
    %v1217 = vunpack.c.h.b16 %v1128
    %v1218 = vunpack.c.l.b16 %v1129
    %v1219 = vunpack.c.h.b16 %v1129
    %v1220 = vunpack.c.l.b16 %v1130
    %v1221 = vunpack.c.h.b16 %v1130
    %v1222 = vunpack.c.l.b16 %v1131
    %v1223 = vunpack.c.h.b16 %v1131
    %v1224 = vunpack.c.l.b16 %v1132
    %v1225 = vunpack.c.h.b16 %v1132
    %v1226 = vunpack.c.l.b16 %v1133
    %v1227 = vunpack.c.h.b16 %v1133
    %v1228 = vunpack.c.l.b16 %v1134
    %v1229 = vunpack.c.h.b16 %v1134
    %v1230 = vunpack.c.l.b16 %v1135
    %v1231 = vunpack.c.h.b16 %v1135
    %v1232 = vpack.c.b16 %v1170, %v1168
    %v1233 = vpack.c.b16 %v1171, %v1169
    %v1234 = vpack.c.b16 %v1174, %v1172
    %v1235 = vpack.c.b16 %v1175, %v1173
    %v1236 = vpack.c.b16 %v1178, %v1176
    %v1237 = vpack.c.b16 %v1179, %v1177
    %v1238 = vpack.c.b16 %v1182, %v1180
    %v1239 = vpack.c.b16 %v1183, %v1181
    %v1240 = vpack.c.b16 %v1186, %v1184
    %v1241 = vpack.c.b16 %v1187, %v1185
    %v1242 = vpack.c.b16 %v1190, %v1188
    %v1243 = vpack.c.b16 %v1191, %v1189
    %v1244 = vpack.c.b16 %v1194, %v1192
    %v1245 = vpack.c.b16 %v1195, %v1193
    %v1246 = vpack.c.b16 %v1198, %v1196
    %v1247 = vpack.c.b16 %v1199, %v1197
    %v1248 = vpack.c.b16 %v1202, %v1200
    %v1249 = vpack.c.b16 %v1203, %v1201
    %v1250 = vpack.c.b16 %v1206, %v1204
    %v1251 = vpack.c.b16 %v1207, %v1205
    %v1252 = vpack.c.b16 %v1210, %v1208
    %v1253 = vpack.c.b16 %v1211, %v1209
    %v1254 = vpack.c.b16 %v1214, %v1212
    %v1255 = vpack.c.b16 %v1215, %v1213
    %v1256 = vpack.c.b16 %v1218, %v1216
    %v1257 = vpack.c.b16 %v1219, %v1217
    %v1258 = vpack.c.b16 %v1222, %v1220
    %v1259 = vpack.c.b16 %v1223, %v1221
    %v1260 = vpack.c.b16 %v1226, %v1224
    %v1261 = vpack.c.b16 %v1227, %v1225
    %v1262 = vpack.c.b16 %v1230, %v1228
    %v1263 = vpack.c.b16 %v1231, %v1229
    %1296 = vmatprep.subr.bf16.mxu0 %v1233
    %1297 = vmatpush1.bf16.msra.mxu0 %v1232
    %1298 = vmatprep.subr.bf16.mxu0 %v1235
    %1299 = vmatpush1.bf16.msra.mxu0 %v1234
    %1300 = vmatprep.subr.bf16.mxu0 %v1237
    %1301 = vmatpush1.bf16.msra.mxu0 %v1236
    %1302 = vmatprep.subr.bf16.mxu0 %v1239
    %1303 = vmatpush1.bf16.msra.mxu0 %v1238
    %1304 = vmatprep.subr.bf16.mxu0 %v1241
    %1305 = vmatpush1.bf16.msra.mxu0 %v1240
    %1306 = vmatprep.subr.bf16.mxu0 %v1243
    %1307 = vmatpush1.bf16.msra.mxu0 %v1242
    %1308 = vmatprep.subr.bf16.mxu0 %v1245
    %1309 = vmatpush1.bf16.msra.mxu0 %v1244
    %1310 = vmatprep.subr.bf16.mxu0 %v1247
    %1311 = vmatpush1.bf16.msra.mxu0 %v1246
    %1312 = vmatprep.subr.bf16.mxu0 %v1249
    %1313 = vmatpush1.bf16.msra.mxu0 %v1248
    %1314 = vmatprep.subr.bf16.mxu0 %v1251
    %1315 = vmatpush1.bf16.msra.mxu0 %v1250
    %1316 = vmatprep.subr.bf16.mxu0 %v1253
    %1317 = vmatpush1.bf16.msra.mxu0 %v1252
    %1318 = vmatprep.subr.bf16.mxu0 %v1255
    %1319 = vmatpush1.bf16.msra.mxu0 %v1254
    %1320 = vmatprep.subr.bf16.mxu0 %v1257
    %1321 = vmatpush1.bf16.msra.mxu0 %v1256
    %1322 = vmatprep.subr.bf16.mxu0 %v1259
    %1323 = vmatpush1.bf16.msra.mxu0 %v1258
    %1324 = vmatprep.subr.bf16.mxu0 %v1261
    %1325 = vmatpush1.bf16.msra.mxu0 %v1260
    %1326 = vmatprep.subr.bf16.mxu0 %v1263
    %1327 = vmatpush1.bf16.msra.mxu0 %v1262
    %1328 = vmatprep.mubr.bf16.mxu0 %v683
    %1329 = vmatmul.mubr.bf16.gmra.mrb[0].mxu0 %v682
    %v1330 = vpop.f32.mrb[0].mxu0
    %v1331 = vadd.f32 0.0, %v1330
    %v1332 = vpop.f32.mrb[0].mxu0
    %v1333 = vadd.f32 0.0, %v1332
    %v1334 = vpop.f32.mrb[0].mxu0
    %v1335 = vadd.f32 0.0, %v1334
    %v1336 = vpop.f32.mrb[0].mxu0
    %v1337 = vadd.f32 0.0, %v1336
    %1338 = vmatprep.mubr.bf16.mxu0 %v685
    %1339 = vmatmul.mubr.bf16.gmra.mrb[0].mxu0 %v684
    %v1340 = vpop.f32.mrb[0].mxu0
    %v1341 = vadd.f32 0.0, %v1340
    %v1342 = vpop.f32.mrb[0].mxu0
    %v1343 = vadd.f32 0.0, %v1342
    %v1344 = vpop.f32.mrb[0].mxu0
    %v1345 = vadd.f32 0.0, %v1344
    %v1346 = vpop.f32.mrb[0].mxu0
    %v1347 = vadd.f32 0.0, %v1346
    %1348 = vmatprep.mubr.bf16.mxu0 %v687
    %1349 = vmatmul.mubr.bf16.gmra.mrb[0].mxu0 %v686
    %v1350 = vpop.f32.mrb[0].mxu0
    %v1351 = vadd.f32 0.0, %v1350
    %v1352 = vpop.f32.mrb[0].mxu0
    %v1353 = vadd.f32 0.0, %v1352
    %v1354 = vpop.f32.mrb[0].mxu0
    %v1355 = vadd.f32 0.0, %v1354
    %v1356 = vpop.f32.mrb[0].mxu0
    %v1357 = vadd.f32 0.0, %v1356
    %1358 = vmatprep.mubr.bf16.mxu0 %v689
    %1359 = vmatmul.mubr.bf16.gmra.mrb[0].mxu0 %v688
    %v1360 = vpop.f32.mrb[0].mxu0
    %v1361 = vadd.f32 0.0, %v1360
    %v1362 = vpop.f32.mrb[0].mxu0
    %v1363 = vadd.f32 0.0, %v1362
    %v1364 = vpop.f32.mrb[0].mxu0
    %v1365 = vadd.f32 0.0, %v1364
    %v1366 = vpop.f32.mrb[0].mxu0
    %v1367 = vadd.f32 0.0, %v1366
    %1368 = vmatprep.mubr.bf16.mxu0 %v691
    %1369 = vmatmul.mubr.bf16.gmra.mrb[0].mxu0 %v690
    %v1370 = vpop.f32.mrb[0].mxu0
    %v1371 = vadd.f32 0.0, %v1370
    %v1372 = vpop.f32.mrb[0].mxu0
    %v1373 = vadd.f32 0.0, %v1372
    %v1374 = vpop.f32.mrb[0].mxu0
    %v1375 = vadd.f32 0.0, %v1374
    %v1376 = vpop.f32.mrb[0].mxu0
    %v1377 = vadd.f32 0.0, %v1376
    %1378 = vmatprep.mubr.bf16.mxu0 %v693
    %1379 = vmatmul.mubr.bf16.gmra.mrb[0].mxu0 %v692
    %v1380 = vpop.f32.mrb[0].mxu0
    %v1381 = vadd.f32 0.0, %v1380
    %v1382 = vpop.f32.mrb[0].mxu0
    %v1383 = vadd.f32 0.0, %v1382
    %v1384 = vpop.f32.mrb[0].mxu0
    %v1385 = vadd.f32 0.0, %v1384
    %v1386 = vpop.f32.mrb[0].mxu0
    %v1387 = vadd.f32 0.0, %v1386
    %1388 = vmatprep.mubr.bf16.mxu0 %v695
    %1389 = vmatmul.mubr.bf16.gmra.mrb[0].mxu0 %v694
    %v1390 = vpop.f32.mrb[0].mxu0
    %v1391 = vadd.f32 0.0, %v1390
    %v1392 = vpop.f32.mrb[0].mxu0
    %v1393 = vadd.f32 0.0, %v1392
    %v1394 = vpop.f32.mrb[0].mxu0
    %v1395 = vadd.f32 0.0, %v1394
    %v1396 = vpop.f32.mrb[0].mxu0
    %v1397 = vadd.f32 0.0, %v1396
    %1398 = vmatprep.mubr.bf16.mxu0 %v697
    %1399 = vmatmul.mubr.bf16.gmra.mrb[0].mxu0 %v696
    %v1400 = vpop.f32.mrb[0].mxu0
    %v1401 = vadd.f32 0.0, %v1400
    %v1402 = vpop.f32.mrb[0].mxu0
    %v1403 = vadd.f32 0.0, %v1402
    %v1404 = vpop.f32.mrb[0].mxu0
    %v1405 = vadd.f32 0.0, %v1404
    %v1406 = vpop.f32.mrb[0].mxu0
    %v1407 = vadd.f32 0.0, %v1406
    %1408 = vmatprep.mubr.bf16.mxu0 %v699
    %1409 = vmatmul.mubr.bf16.gmra.mrb[0].mxu0 %v698
    %v1410 = vpop.f32.mrb[0].mxu0
    %v1411 = vadd.f32 0.0, %v1410
    %v1412 = vpop.f32.mrb[0].mxu0
    %v1413 = vadd.f32 0.0, %v1412
    %v1414 = vpop.f32.mrb[0].mxu0
    %v1415 = vadd.f32 0.0, %v1414
    %v1416 = vpop.f32.mrb[0].mxu0
    %v1417 = vadd.f32 0.0, %v1416
    %1418 = vmatprep.mubr.bf16.mxu0 %v701
    %1419 = vmatmul.mubr.bf16.gmra.mrb[0].mxu0 %v700
    %v1420 = vpop.f32.mrb[0].mxu0
    %v1421 = vadd.f32 0.0, %v1420
    %v1422 = vpop.f32.mrb[0].mxu0
    %v1423 = vadd.f32 0.0, %v1422
    %v1424 = vpop.f32.mrb[0].mxu0
    %v1425 = vadd.f32 0.0, %v1424
    %v1426 = vpop.f32.mrb[0].mxu0
    %v1427 = vadd.f32 0.0, %v1426
    %1428 = vmatprep.mubr.bf16.mxu0 %v703
    %1429 = vmatmul.mubr.bf16.gmra.mrb[0].mxu0 %v702
    %v1430 = vpop.f32.mrb[0].mxu0
    %v1431 = vadd.f32 0.0, %v1430
    %v1432 = vpop.f32.mrb[0].mxu0
    %v1433 = vadd.f32 0.0, %v1432
    %v1434 = vpop.f32.mrb[0].mxu0
    %v1435 = vadd.f32 0.0, %v1434
    %v1436 = vpop.f32.mrb[0].mxu0
    %v1437 = vadd.f32 0.0, %v1436
    %1438 = vmatprep.mubr.bf16.mxu0 %v705
    %1439 = vmatmul.mubr.bf16.gmra.mrb[0].mxu0 %v704
    %v1440 = vpop.f32.mrb[0].mxu0
    %v1441 = vadd.f32 0.0, %v1440
    %v1442 = vpop.f32.mrb[0].mxu0
    %v1443 = vadd.f32 0.0, %v1442
    %v1444 = vpop.f32.mrb[0].mxu0
    %v1445 = vadd.f32 0.0, %v1444
    %v1446 = vpop.f32.mrb[0].mxu0
    %v1447 = vadd.f32 0.0, %v1446
    %1448 = vmatprep.mubr.bf16.mxu0 %v707
    %1449 = vmatmul.mubr.bf16.gmra.mrb[0].mxu0 %v706
    %v1450 = vpop.f32.mrb[0].mxu0
    %v1451 = vadd.f32 0.0, %v1450
    %v1452 = vpop.f32.mrb[0].mxu0
    %v1453 = vadd.f32 0.0, %v1452
    %v1454 = vpop.f32.mrb[0].mxu0
    %v1455 = vadd.f32 0.0, %v1454
    %v1456 = vpop.f32.mrb[0].mxu0
    %v1457 = vadd.f32 0.0, %v1456
    %1458 = vmatprep.mubr.bf16.mxu0 %v709
    %1459 = vmatmul.mubr.bf16.gmra.mrb[0].mxu0 %v708
    %v1460 = vpop.f32.mrb[0].mxu0
    %v1461 = vadd.f32 0.0, %v1460
    %v1462 = vpop.f32.mrb[0].mxu0
    %v1463 = vadd.f32 0.0, %v1462
    %v1464 = vpop.f32.mrb[0].mxu0
    %v1465 = vadd.f32 0.0, %v1464
    %v1466 = vpop.f32.mrb[0].mxu0
    %v1467 = vadd.f32 0.0, %v1466
    %1468 = vmatprep.mubr.bf16.mxu0 %v711
    %1469 = vmatmul.mubr.bf16.gmra.mrb[0].mxu0 %v710
    %v1470 = vpop.f32.mrb[0].mxu0
    %v1471 = vadd.f32 0.0, %v1470
    %v1472 = vpop.f32.mrb[0].mxu0
    %v1473 = vadd.f32 0.0, %v1472
    %v1474 = vpop.f32.mrb[0].mxu0
    %v1475 = vadd.f32 0.0, %v1474
    %v1476 = vpop.f32.mrb[0].mxu0
    %v1477 = vadd.f32 0.0, %v1476
    %1478 = vmatprep.mubr.bf16.mxu0 %v713
    %1479 = vmatmul.mubr.bf16.gmra.mrb[0].mxu0 %v712
    %v1480 = vpop.f32.mrb[0].mxu0
    %v1481 = vadd.f32 0.0, %v1480
    %v1482 = vpop.f32.mrb[0].mxu0
    %v1483 = vadd.f32 0.0, %v1482
    %v1484 = vpop.f32.mrb[0].mxu0
    %v1485 = vadd.f32 0.0, %v1484
    %v1486 = vpop.f32.mrb[0].mxu0
    %v1487 = vadd.f32 0.0, %v1486
    %1488 = vmatprep.mubr.bf16.mxu0 %v715
    %1489 = vmatmul.mubr.bf16.gmra.mrb[0].mxu0 %v714
    %v1490 = vpop.f32.mrb[0].mxu0
    %v1491 = vadd.f32 0.0, %v1490
    %v1492 = vpop.f32.mrb[0].mxu0
    %v1493 = vadd.f32 0.0, %v1492
    %v1494 = vpop.f32.mrb[0].mxu0
    %v1495 = vadd.f32 0.0, %v1494
    %v1496 = vpop.f32.mrb[0].mxu0
    %v1497 = vadd.f32 0.0, %v1496
    %1498 = vmatprep.mubr.bf16.mxu0 %v717
    %1499 = vmatmul.mubr.bf16.gmra.mrb[0].mxu0 %v716
    %v1500 = vpop.f32.mrb[0].mxu0
    %v1501 = vadd.f32 0.0, %v1500
    %v1502 = vpop.f32.mrb[0].mxu0
    %v1503 = vadd.f32 0.0, %v1502
    %v1504 = vpop.f32.mrb[0].mxu0
    %v1505 = vadd.f32 0.0, %v1504
    %v1506 = vpop.f32.mrb[0].mxu0
    %v1507 = vadd.f32 0.0, %v1506
    %1508 = vmatprep.mubr.bf16.mxu0 %v719
    %1509 = vmatmul.mubr.bf16.gmra.mrb[0].mxu0 %v718
    %v1510 = vpop.f32.mrb[0].mxu0
    %v1511 = vadd.f32 0.0, %v1510
    %v1512 = vpop.f32.mrb[0].mxu0
    %v1513 = vadd.f32 0.0, %v1512
    %v1514 = vpop.f32.mrb[0].mxu0
    %v1515 = vadd.f32 0.0, %v1514
    %v1516 = vpop.f32.mrb[0].mxu0
    %v1517 = vadd.f32 0.0, %v1516
    %1518 = vdwg.mxu0
    %v1519 = vadd.f32 %v1028, %v1331
    %v1520 = vadd.f32 %v1029, %v1333
    %v1521 = vadd.f32 %v1030, %v1335
    %v1522 = vadd.f32 %v1031, %v1337
    %v1523 = vadd.f32 %v1032, %v1341
    %v1524 = vadd.f32 %v1033, %v1343
    %v1525 = vadd.f32 %v1034, %v1345
    %v1526 = vadd.f32 %v1035, %v1347
    %v1527 = vadd.f32 %v1036, %v1351
    %v1528 = vadd.f32 %v1037, %v1353
    %v1529 = vadd.f32 %v1038, %v1355
    %v1530 = vadd.f32 %v1039, %v1357
    %v1531 = vadd.f32 %v1040, %v1361
    %v1532 = vadd.f32 %v1041, %v1363
    %v1533 = vadd.f32 %v1042, %v1365
    %v1534 = vadd.f32 %v1043, %v1367
    %v1535 = vadd.f32 %v1044, %v1371
    %v1536 = vadd.f32 %v1045, %v1373
    %v1537 = vadd.f32 %v1046, %v1375
    %v1538 = vadd.f32 %v1047, %v1377
    %v1539 = vadd.f32 %v1048, %v1381
    %v1540 = vadd.f32 %v1049, %v1383
    %v1541 = vadd.f32 %v1050, %v1385
    %v1542 = vadd.f32 %v1051, %v1387
    %v1543 = vadd.f32 %v1052, %v1391
    %v1544 = vadd.f32 %v1053, %v1393
    %v1545 = vadd.f32 %v1054, %v1395
    %v1546 = vadd.f32 %v1055, %v1397
    %v1547 = vadd.f32 %v1056, %v1401
    %v1548 = vadd.f32 %v1057, %v1403
    %v1549 = vadd.f32 %v1058, %v1405
    %v1550 = vadd.f32 %v1059, %v1407
    %v1551 = vadd.f32 %v1060, %v1411
    %v1552 = vadd.f32 %v1061, %v1413
    %v1553 = vadd.f32 %v1062, %v1415
    %v1554 = vadd.f32 %v1063, %v1417
    %v1555 = vadd.f32 %v1064, %v1421
    %v1556 = vadd.f32 %v1065, %v1423
    %v1557 = vadd.f32 %v1066, %v1425
    %v1558 = vadd.f32 %v1067, %v1427
    %v1559 = vadd.f32 %v1068, %v1431
    %v1560 = vadd.f32 %v1069, %v1433
    %v1561 = vadd.f32 %v1070, %v1435
    %v1562 = vadd.f32 %v1071, %v1437
    %v1563 = vadd.f32 %v1072, %v1441
    %v1564 = vadd.f32 %v1073, %v1443
    %v1565 = vadd.f32 %v1074, %v1445
    %v1566 = vadd.f32 %v1075, %v1447
    %v1567 = vadd.f32 %v1076, %v1451
    %v1568 = vadd.f32 %v1077, %v1453
    %v1569 = vadd.f32 %v1078, %v1455
    %v1570 = vadd.f32 %v1079, %v1457
    %v1571 = vadd.f32 %v1080, %v1461
    %v1572 = vadd.f32 %v1081, %v1463
    %v1573 = vadd.f32 %v1082, %v1465
    %v1574 = vadd.f32 %v1083, %v1467
    %v1575 = vadd.f32 %v1084, %v1471
    %v1576 = vadd.f32 %v1085, %v1473
    %v1577 = vadd.f32 %v1086, %v1475
    %v1578 = vadd.f32 %v1087, %v1477
    %v1579 = vadd.f32 %v1088, %v1481
    %v1580 = vadd.f32 %v1089, %v1483
    %v1581 = vadd.f32 %v1090, %v1485
    %v1582 = vadd.f32 %v1091, %v1487
    %v1583 = vadd.f32 %v1092, %v1491
    %v1584 = vadd.f32 %v1093, %v1493
    %v1585 = vadd.f32 %v1094, %v1495
    %v1586 = vadd.f32 %v1095, %v1497
    %v1587 = vadd.f32 %v1096, %v1501
    %v1588 = vadd.f32 %v1097, %v1503
    %v1589 = vadd.f32 %v1098, %v1505
    %v1590 = vadd.f32 %v1099, %v1507
    %v1591 = vadd.f32 %v1100, %v1511
    %v1592 = vadd.f32 %v1101, %v1513
    %v1593 = vadd.f32 %v1102, %v1515
    %v1594 = vadd.f32 %v1103, %v1517
    %1595 = vst [vmem:[#allocation2] sm:$0xff] %v1519
    %1596 = vst [vmem:[#allocation2 + $0x8] sm:$0xff] %v1520
    %1597 = vst [vmem:[#allocation2 + $0x10] sm:$0xff] %v1521
    %1598 = vst [vmem:[#allocation2 + $0x18] sm:$0xff] %v1522
    %1599 = vst [vmem:[#allocation2 + $0x20] sm:$0xff] %v1523
    %1600 = vst [vmem:[#allocation2 + $0x28] sm:$0xff] %v1524
    %1601 = vst [vmem:[#allocation2 + $0x30] sm:$0xff] %v1525
    %1602 = vst [vmem:[#allocation2 + $0x38] sm:$0xff] %v1526
    %1603 = vst [vmem:[#allocation2 + $0x40] sm:$0xff] %v1527
    %1604 = vst [vmem:[#allocation2 + $0x48] sm:$0xff] %v1528
    %1605 = vst [vmem:[#allocation2 + $0x50] sm:$0xff] %v1529
    %1606 = vst [vmem:[#allocation2 + $0x58] sm:$0xff] %v1530
    %1607 = vst [vmem:[#allocation2 + $0x60] sm:$0xff] %v1531
    %1608 = vst [vmem:[#allocation2 + $0x68] sm:$0xff] %v1532
    %1609 = vst [vmem:[#allocation2 + $0x70] sm:$0xff] %v1533
    %1610 = vst [vmem:[#allocation2 + $0x78] sm:$0xff] %v1534
    %1611 = vst [vmem:[#allocation2 + $0x80] sm:$0xff] %v1535
    %1612 = vst [vmem:[#allocation2 + $0x88] sm:$0xff] %v1536
    %1613 = vst [vmem:[#allocation2 + $0x90] sm:$0xff] %v1537
    %1614 = vst [vmem:[#allocation2 + $0x98] sm:$0xff] %v1538
    %1615 = vst [vmem:[#allocation2 + $0xa0] sm:$0xff] %v1539
    %1616 = vst [vmem:[#allocation2 + $0xa8] sm:$0xff] %v1540
    %1617 = vst [vmem:[#allocation2 + $0xb0] sm:$0xff] %v1541
    %1618 = vst [vmem:[#allocation2 + $0xb8] sm:$0xff] %v1542
    %1619 = vst [vmem:[#allocation2 + $0xc0] sm:$0xff] %v1543
    %1620 = vst [vmem:[#allocation2 + $0xc8] sm:$0xff] %v1544
    %1621 = vst [vmem:[#allocation2 + $0xd0] sm:$0xff] %v1545
    %1622 = vst [vmem:[#allocation2 + $0xd8] sm:$0xff] %v1546
    %1623 = vst [vmem:[#allocation2 + $0xe0] sm:$0xff] %v1547
    %1624 = vst [vmem:[#allocation2 + $0xe8] sm:$0xff] %v1548
    %1625 = vst [vmem:[#allocation2 + $0xf0] sm:$0xff] %v1549
    %1626 = vst [vmem:[#allocation2 + $0xf8] sm:$0xff] %v1550
    %1627 = vst [vmem:[#allocation2 + $0x100] sm:$0xff] %v1551
    %1628 = vst [vmem:[#allocation2 + $0x108] sm:$0xff] %v1552
    %1629 = vst [vmem:[#allocation2 + $0x110] sm:$0xff] %v1553
    %1630 = vst [vmem:[#allocation2 + $0x118] sm:$0xff] %v1554
    %1631 = vst [vmem:[#allocation2 + $0x120] sm:$0xff] %v1555
    %1632 = vst [vmem:[#allocation2 + $0x128] sm:$0xff] %v1556
    %1633 = vst [vmem:[#allocation2 + $0x130] sm:$0xff] %v1557
    %1634 = vst [vmem:[#allocation2 + $0x138] sm:$0xff] %v1558
    %1635 = vst [vmem:[#allocation2 + $0x140] sm:$0xff] %v1559
    %1636 = vst [vmem:[#allocation2 + $0x148] sm:$0xff] %v1560
    %1637 = vst [vmem:[#allocation2 + $0x150] sm:$0xff] %v1561
    %1638 = vst [vmem:[#allocation2 + $0x158] sm:$0xff] %v1562
    %1639 = vst [vmem:[#allocation2 + $0x160] sm:$0xff] %v1563
    %1640 = vst [vmem:[#allocation2 + $0x168] sm:$0xff] %v1564
    %1641 = vst [vmem:[#allocation2 + $0x170] sm:$0xff] %v1565
    %1642 = vst [vmem:[#allocation2 + $0x178] sm:$0xff] %v1566
    %1643 = vst [vmem:[#allocation2 + $0x180] sm:$0xff] %v1567
    %1644 = vst [vmem:[#allocation2 + $0x188] sm:$0xff] %v1568
    %1645 = vst [vmem:[#allocation2 + $0x190] sm:$0xff] %v1569
    %1646 = vst [vmem:[#allocation2 + $0x198] sm:$0xff] %v1570
    %1647 = vst [vmem:[#allocation2 + $0x1a0] sm:$0xff] %v1571
    %1648 = vst [vmem:[#allocation2 + $0x1a8] sm:$0xff] %v1572
    %1649 = vst [vmem:[#allocation2 + $0x1b0] sm:$0xff] %v1573
    %1650 = vst [vmem:[#allocation2 + $0x1b8] sm:$0xff] %v1574
    %1651 = vst [vmem:[#allocation2 + $0x1c0] sm:$0xff] %v1575
    %1652 = vst [vmem:[#allocation2 + $0x1c8] sm:$0xff] %v1576
    %1653 = vst [vmem:[#allocation2 + $0x1d0] sm:$0xff] %v1577
    %1654 = vst [vmem:[#allocation2 + $0x1d8] sm:$0xff] %v1578
    %1655 = vst [vmem:[#allocation2 + $0x1e0] sm:$0xff] %v1579
    %1656 = vst [vmem:[#allocation2 + $0x1e8] sm:$0xff] %v1580
    %1657 = vst [vmem:[#allocation2 + $0x1f0] sm:$0xff] %v1581
    %1658 = vst [vmem:[#allocation2 + $0x1f8] sm:$0xff] %v1582
    %1659 = vst [vmem:[#allocation2 + $0x200] sm:$0xff] %v1583
    %1660 = vst [vmem:[#allocation2 + $0x208] sm:$0xff] %v1584
    %1661 = vst [vmem:[#allocation2 + $0x210] sm:$0xff] %v1585
    %1662 = vst [vmem:[#allocation2 + $0x218] sm:$0xff] %v1586
    %1663 = vst [vmem:[#allocation2 + $0x220] sm:$0xff] %v1587
    %1664 = vst [vmem:[#allocation2 + $0x228] sm:$0xff] %v1588
    %1665 = vst [vmem:[#allocation2 + $0x230] sm:$0xff] %v1589
    %1666 = vst [vmem:[#allocation2 + $0x238] sm:$0xff] %v1590
    %1667 = vst [vmem:[#allocation2 + $0x240] sm:$0xff] %v1591
    %1668 = vst [vmem:[#allocation2 + $0x248] sm:$0xff] %v1592
    %1669 = vst [vmem:[#allocation2 + $0x250] sm:$0xf] %v1593
    %1670 = vst [vmem:[#allocation2 + $0x258] sm:$0xf] %v1594
    // Predicated region
    $region38: #{tpu_custom_call.1} parent=1 // pred_check
      %p1671 = pneg %p948
    $region39: #{tpu_custom_call.1} parent=1 // pred_check_branch
      %1673 = sbr.rel (%p1671) target = $region41
    $region40: #{tpu_custom_call.1} parent=1 // pred_region
      %v1674 = vld [vmem:[#allocation2] sm:$0xff]
      %v1675 = vld [vmem:[#allocation2 + $0x8] sm:$0xff]
      %v1676 = vld [vmem:[#allocation2 + $0x10] sm:$0xff]
      %v1677 = vld [vmem:[#allocation2 + $0x18] sm:$0xff]
      %v1678 = vld [vmem:[#allocation2 + $0x20] sm:$0xff]
      %v1679 = vld [vmem:[#allocation2 + $0x28] sm:$0xff]
      %v1680 = vld [vmem:[#allocation2 + $0x30] sm:$0xff]
      %v1681 = vld [vmem:[#allocation2 + $0x38] sm:$0xff]
      %v1682 = vld [vmem:[#allocation2 + $0x40] sm:$0xff]
      %v1683 = vld [vmem:[#allocation2 + $0x48] sm:$0xff]
      %v1684 = vld [vmem:[#allocation2 + $0x50] sm:$0xff]
      %v1685 = vld [vmem:[#allocation2 + $0x58] sm:$0xff]
      %v1686 = vld [vmem:[#allocation2 + $0x60] sm:$0xff]
      %v1687 = vld [vmem:[#allocation2 + $0x68] sm:$0xff]
      %v1688 = vld [vmem:[#allocation2 + $0x70] sm:$0xff]
      %v1689 = vld [vmem:[#allocation2 + $0x78] sm:$0xff]
      %v1690 = vld [vmem:[#allocation2 + $0x80] sm:$0xff]
      %v1691 = vld [vmem:[#allocation2 + $0x88] sm:$0xff]
      %v1692 = vld [vmem:[#allocation2 + $0x90] sm:$0xff]
      %v1693 = vld [vmem:[#allocation2 + $0x98] sm:$0xff]
      %v1694 = vld [vmem:[#allocation2 + $0xa0] sm:$0xff]
      %v1695 = vld [vmem:[#allocation2 + $0xa8] sm:$0xff]
      %v1696 = vld [vmem:[#allocation2 + $0xb0] sm:$0xff]
      %v1697 = vld [vmem:[#allocation2 + $0xb8] sm:$0xff]
      %v1698 = vld [vmem:[#allocation2 + $0xc0] sm:$0xff]
      %v1699 = vld [vmem:[#allocation2 + $0xc8] sm:$0xff]
      %v1700 = vld [vmem:[#allocation2 + $0xd0] sm:$0xff]
      %v1701 = vld [vmem:[#allocation2 + $0xd8] sm:$0xff]
      %v1702 = vld [vmem:[#allocation2 + $0xe0] sm:$0xff]
      %v1703 = vld [vmem:[#allocation2 + $0xe8] sm:$0xff]
      %v1704 = vld [vmem:[#allocation2 + $0xf0] sm:$0xff]
      %v1705 = vld [vmem:[#allocation2 + $0xf8] sm:$0xff]
      %v1706 = vld [vmem:[#allocation2 + $0x100] sm:$0xff]
      %v1707 = vld [vmem:[#allocation2 + $0x108] sm:$0xff]
      %v1708 = vld [vmem:[#allocation2 + $0x110] sm:$0xff]
      %v1709 = vld [vmem:[#allocation2 + $0x118] sm:$0xff]
      %v1710 = vld [vmem:[#allocation2 + $0x120] sm:$0xff]
      %v1711 = vld [vmem:[#allocation2 + $0x128] sm:$0xff]
      %v1712 = vld [vmem:[#allocation2 + $0x130] sm:$0xff]
      %v1713 = vld [vmem:[#allocation2 + $0x138] sm:$0xff]
      %v1714 = vld [vmem:[#allocation2 + $0x140] sm:$0xff]
      %v1715 = vld [vmem:[#allocation2 + $0x148] sm:$0xff]
      %v1716 = vld [vmem:[#allocation2 + $0x150] sm:$0xff]
      %v1717 = vld [vmem:[#allocation2 + $0x158] sm:$0xff]
      %v1718 = vld [vmem:[#allocation2 + $0x160] sm:$0xff]
      %v1719 = vld [vmem:[#allocation2 + $0x168] sm:$0xff]
      %v1720 = vld [vmem:[#allocation2 + $0x170] sm:$0xff]
      %v1721 = vld [vmem:[#allocation2 + $0x178] sm:$0xff]
      %v1722 = vld [vmem:[#allocation2 + $0x180] sm:$0xff]
      %v1723 = vld [vmem:[#allocation2 + $0x188] sm:$0xff]
      %v1724 = vld [vmem:[#allocation2 + $0x190] sm:$0xff]
      %v1725 = vld [vmem:[#allocation2 + $0x198] sm:$0xff]
      %v1726 = vld [vmem:[#allocation2 + $0x1a0] sm:$0xff]
      %v1727 = vld [vmem:[#allocation2 + $0x1a8] sm:$0xff]
      %v1728 = vld [vmem:[#allocation2 + $0x1b0] sm:$0xff]
      %v1729 = vld [vmem:[#allocation2 + $0x1b8] sm:$0xff]
      %v1730 = vld [vmem:[#allocation2 + $0x1c0] sm:$0xff]
      %v1731 = vld [vmem:[#allocation2 + $0x1c8] sm:$0xff]
      %v1732 = vld [vmem:[#allocation2 + $0x1d0] sm:$0xff]
      %v1733 = vld [vmem:[#allocation2 + $0x1d8] sm:$0xff]
      %v1734 = vld [vmem:[#allocation2 + $0x1e0] sm:$0xff]
      %v1735 = vld [vmem:[#allocation2 + $0x1e8] sm:$0xff]
      %v1736 = vld [vmem:[#allocation2 + $0x1f0] sm:$0xff]
      %v1737 = vld [vmem:[#allocation2 + $0x1f8] sm:$0xff]
      %v1738 = vld [vmem:[#allocation2 + $0x200] sm:$0xff]
      %v1739 = vld [vmem:[#allocation2 + $0x208] sm:$0xff]
      %v1740 = vld [vmem:[#allocation2 + $0x210] sm:$0xff]
      %v1741 = vld [vmem:[#allocation2 + $0x218] sm:$0xff]
      %v1742 = vld [vmem:[#allocation2 + $0x220] sm:$0xff]
      %v1743 = vld [vmem:[#allocation2 + $0x228] sm:$0xff]
      %v1744 = vld [vmem:[#allocation2 + $0x230] sm:$0xff]
      %v1745 = vld [vmem:[#allocation2 + $0x238] sm:$0xff]
      %v1746 = vld [vmem:[#allocation2 + $0x240] sm:$0xff]
      %v1747 = vld [vmem:[#allocation2 + $0x248] sm:$0xff]
      %v1748 = vld [vmem:[#allocation2 + $0x250] sm:$0xf]
      %v1749 = vld [vmem:[#allocation2 + $0x258] sm:$0xf]
      %v1750 = vld [vmem:[%s4] sm:$0x3]
      %v1752 = vlaneseq
      %v1753 = vshrl.u32 %v1752, 7
      %v1754 = vsub.s32 0, %v1753
      %v1755 = vrot.slane %v1750, %v1754
      %v1756 = vlaneseq
      %v1757 = vshrl.u32 %v1756, 7
      %v1758 = vsub.s32 1, %v1757
      %v1759 = vrot.slane %v1750, %v1758
      %v1762 = vadd.f32 %v1674, %v1755
      %v1763 = vadd.f32 %v1675, %v1759
      %v1764 = vadd.f32 %v1676, %v1755
      %v1765 = vadd.f32 %v1677, %v1759
      %v1766 = vadd.f32 %v1678, %v1755
      %v1767 = vadd.f32 %v1679, %v1759
      %v1768 = vadd.f32 %v1680, %v1755
      %v1769 = vadd.f32 %v1681, %v1759
      %v1770 = vadd.f32 %v1682, %v1755
      %v1771 = vadd.f32 %v1683, %v1759
      %v1772 = vadd.f32 %v1684, %v1755
      %v1773 = vadd.f32 %v1685, %v1759
      %v1774 = vadd.f32 %v1686, %v1755
      %v1775 = vadd.f32 %v1687, %v1759
      %v1776 = vadd.f32 %v1688, %v1755
      %v1777 = vadd.f32 %v1689, %v1759
      %v1778 = vadd.f32 %v1690, %v1755
      %v1779 = vadd.f32 %v1691, %v1759
      %v1780 = vadd.f32 %v1692, %v1755
      %v1781 = vadd.f32 %v1693, %v1759
      %v1782 = vadd.f32 %v1694, %v1755
      %v1783 = vadd.f32 %v1695, %v1759
      %v1784 = vadd.f32 %v1696, %v1755
      %v1785 = vadd.f32 %v1697, %v1759
      %v1786 = vadd.f32 %v1698, %v1755
      %v1787 = vadd.f32 %v1699, %v1759
      %v1788 = vadd.f32 %v1700, %v1755
      %v1789 = vadd.f32 %v1701, %v1759
      %v1790 = vadd.f32 %v1702, %v1755
      %v1791 = vadd.f32 %v1703, %v1759
      %v1792 = vadd.f32 %v1704, %v1755
      %v1793 = vadd.f32 %v1705, %v1759
      %v1794 = vadd.f32 %v1706, %v1755
      %v1795 = vadd.f32 %v1707, %v1759
      %v1796 = vadd.f32 %v1708, %v1755
      %v1797 = vadd.f32 %v1709, %v1759
      %v1798 = vadd.f32 %v1710, %v1755
      %v1799 = vadd.f32 %v1711, %v1759
      %v1800 = vadd.f32 %v1712, %v1755
      %v1801 = vadd.f32 %v1713, %v1759
      %v1802 = vadd.f32 %v1714, %v1755
      %v1803 = vadd.f32 %v1715, %v1759
      %v1804 = vadd.f32 %v1716, %v1755
      %v1805 = vadd.f32 %v1717, %v1759
      %v1806 = vadd.f32 %v1718, %v1755
      %v1807 = vadd.f32 %v1719, %v1759
      %v1808 = vadd.f32 %v1720, %v1755
      %v1809 = vadd.f32 %v1721, %v1759
      %v1810 = vadd.f32 %v1722, %v1755
      %v1811 = vadd.f32 %v1723, %v1759
      %v1812 = vadd.f32 %v1724, %v1755
      %v1813 = vadd.f32 %v1725, %v1759
      %v1814 = vadd.f32 %v1726, %v1755
      %v1815 = vadd.f32 %v1727, %v1759
      %v1816 = vadd.f32 %v1728, %v1755
      %v1817 = vadd.f32 %v1729, %v1759
      %v1818 = vadd.f32 %v1730, %v1755
      %v1819 = vadd.f32 %v1731, %v1759
      %v1820 = vadd.f32 %v1732, %v1755
      %v1821 = vadd.f32 %v1733, %v1759
      %v1822 = vadd.f32 %v1734, %v1755
      %v1823 = vadd.f32 %v1735, %v1759
      %v1824 = vadd.f32 %v1736, %v1755
      %v1825 = vadd.f32 %v1737, %v1759
      %v1826 = vadd.f32 %v1738, %v1755
      %v1827 = vadd.f32 %v1739, %v1759
      %v1828 = vadd.f32 %v1740, %v1755
      %v1829 = vadd.f32 %v1741, %v1759
      %v1830 = vadd.f32 %v1742, %v1755
      %v1831 = vadd.f32 %v1743, %v1759
      %v1832 = vadd.f32 %v1744, %v1755
      %v1833 = vadd.f32 %v1745, %v1759
      %v1834 = vadd.f32 %v1746, %v1755
      %v1835 = vadd.f32 %v1747, %v1759
      %v1836 = vadd.f32 %v1748, %v1755
      %v1837 = vadd.f32 %v1749, %v1759
      %v1838 = vsub.f32 0.0, %v1762
      %v1839 = vsub.f32 0.0, %v1763
      %v1840 = vsub.f32 0.0, %v1764
      %v1841 = vsub.f32 0.0, %v1765
      %v1842 = vsub.f32 0.0, %v1766
      %v1843 = vsub.f32 0.0, %v1767
      %v1844 = vsub.f32 0.0, %v1768
      %v1845 = vsub.f32 0.0, %v1769
      %v1846 = vsub.f32 0.0, %v1770
      %v1847 = vsub.f32 0.0, %v1771
      %v1848 = vsub.f32 0.0, %v1772
      %v1849 = vsub.f32 0.0, %v1773
      %v1850 = vsub.f32 0.0, %v1774
      %v1851 = vsub.f32 0.0, %v1775
      %v1852 = vsub.f32 0.0, %v1776
      %v1853 = vsub.f32 0.0, %v1777
      %v1854 = vsub.f32 0.0, %v1778
      %v1855 = vsub.f32 0.0, %v1779
      %v1856 = vsub.f32 0.0, %v1780
      %v1857 = vsub.f32 0.0, %v1781
      %v1858 = vsub.f32 0.0, %v1782
      %v1859 = vsub.f32 0.0, %v1783
      %v1860 = vsub.f32 0.0, %v1784
      %v1861 = vsub.f32 0.0, %v1785
      %v1862 = vsub.f32 0.0, %v1786
      %v1863 = vsub.f32 0.0, %v1787
      %v1864 = vsub.f32 0.0, %v1788
      %v1865 = vsub.f32 0.0, %v1789
      %v1866 = vsub.f32 0.0, %v1790
      %v1867 = vsub.f32 0.0, %v1791
      %v1868 = vsub.f32 0.0, %v1792
      %v1869 = vsub.f32 0.0, %v1793
      %v1870 = vsub.f32 0.0, %v1794
      %v1871 = vsub.f32 0.0, %v1795
      %v1872 = vsub.f32 0.0, %v1796
      %v1873 = vsub.f32 0.0, %v1797
      %v1874 = vsub.f32 0.0, %v1798
      %v1875 = vsub.f32 0.0, %v1799
      %v1876 = vsub.f32 0.0, %v1800
      %v1877 = vsub.f32 0.0, %v1801
      %v1878 = vsub.f32 0.0, %v1802
      %v1879 = vsub.f32 0.0, %v1803
      %v1880 = vsub.f32 0.0, %v1804
      %v1881 = vsub.f32 0.0, %v1805
      %v1882 = vsub.f32 0.0, %v1806
      %v1883 = vsub.f32 0.0, %v1807
      %v1884 = vsub.f32 0.0, %v1808
      %v1885 = vsub.f32 0.0, %v1809
      %v1886 = vsub.f32 0.0, %v1810
      %v1887 = vsub.f32 0.0, %v1811
      %v1888 = vsub.f32 0.0, %v1812
      %v1889 = vsub.f32 0.0, %v1813
      %v1890 = vsub.f32 0.0, %v1814
      %v1891 = vsub.f32 0.0, %v1815
      %v1892 = vsub.f32 0.0, %v1816
      %v1893 = vsub.f32 0.0, %v1817
      %v1894 = vsub.f32 0.0, %v1818
      %v1895 = vsub.f32 0.0, %v1819
      %v1896 = vsub.f32 0.0, %v1820
      %v1897 = vsub.f32 0.0, %v1821
      %v1898 = vsub.f32 0.0, %v1822
      %v1899 = vsub.f32 0.0, %v1823
      %v1900 = vsub.f32 0.0, %v1824
      %v1901 = vsub.f32 0.0, %v1825
      %v1902 = vsub.f32 0.0, %v1826
      %v1903 = vsub.f32 0.0, %v1827
      %v1904 = vsub.f32 0.0, %v1828
      %v1905 = vsub.f32 0.0, %v1829
      %v1906 = vsub.f32 0.0, %v1830
      %v1907 = vsub.f32 0.0, %v1831
      %v1908 = vsub.f32 0.0, %v1832
      %v1909 = vsub.f32 0.0, %v1833
      %v1910 = vsub.f32 0.0, %v1834
      %v1911 = vsub.f32 0.0, %v1835
      %v1912 = vsub.f32 0.0, %v1836
      %v1913 = vsub.f32 0.0, %v1837
      %v1914 = vmul.f32 %v1838, 1.442695
      %v1915 = vpow.pop %v1914
      %v1916 = vmul.f32 %v1839, 1.442695
      %v1917 = vpow.pop %v1916
      %v1918 = vmul.f32 %v1840, 1.442695
      %v1919 = vpow.pop %v1918
      %v1920 = vmul.f32 %v1841, 1.442695
      %v1921 = vpow.pop %v1920
      %v1922 = vmul.f32 %v1842, 1.442695
      %v1923 = vpow.pop %v1922
      %v1924 = vmul.f32 %v1843, 1.442695
      %v1925 = vpow.pop %v1924
      %v1926 = vmul.f32 %v1844, 1.442695
      %v1927 = vpow.pop %v1926
      %v1928 = vmul.f32 %v1845, 1.442695
      %v1929 = vpow.pop %v1928
      %v1930 = vmul.f32 %v1846, 1.442695
      %v1931 = vpow.pop %v1930
      %v1932 = vmul.f32 %v1847, 1.442695
      %v1933 = vpow.pop %v1932
      %v1934 = vmul.f32 %v1848, 1.442695
      %v1935 = vpow.pop %v1934
      %v1936 = vmul.f32 %v1849, 1.442695
      %v1937 = vpow.pop %v1936
      %v1938 = vmul.f32 %v1850, 1.442695
      %v1939 = vpow.pop %v1938
      %v1940 = vmul.f32 %v1851, 1.442695
      %v1941 = vpow.pop %v1940
      %v1942 = vmul.f32 %v1852, 1.442695
      %v1943 = vpow.pop %v1942
      %v1944 = vmul.f32 %v1853, 1.442695
      %v1945 = vpow.pop %v1944
      %v1946 = vmul.f32 %v1854, 1.442695
      %v1947 = vpow.pop %v1946
      %v1948 = vmul.f32 %v1855, 1.442695
      %v1949 = vpow.pop %v1948
      %v1950 = vmul.f32 %v1856, 1.442695
      %v1951 = vpow.pop %v1950
      %v1952 = vmul.f32 %v1857, 1.442695
      %v1953 = vpow.pop %v1952
      %v1954 = vmul.f32 %v1858, 1.442695
      %v1955 = vpow.pop %v1954
      %v1956 = vmul.f32 %v1859, 1.442695
      %v1957 = vpow.pop %v1956
      %v1958 = vmul.f32 %v1860, 1.442695
      %v1959 = vpow.pop %v1958
      %v1960 = vmul.f32 %v1861, 1.442695
      %v1961 = vpow.pop %v1960
      %v1962 = vmul.f32 %v1862, 1.442695
      %v1963 = vpow.pop %v1962
      %v1964 = vmul.f32 %v1863, 1.442695
      %v1965 = vpow.pop %v1964
      %v1966 = vmul.f32 %v1864, 1.442695
      %v1967 = vpow.pop %v1966
      %v1968 = vmul.f32 %v1865, 1.442695
      %v1969 = vpow.pop %v1968
      %v1970 = vmul.f32 %v1866, 1.442695
      %v1971 = vpow.pop %v1970
      %v1972 = vmul.f32 %v1867, 1.442695
      %v1973 = vpow.pop %v1972
      %v1974 = vmul.f32 %v1868, 1.442695
      %v1975 = vpow.pop %v1974
      %v1976 = vmul.f32 %v1869, 1.442695
      %v1977 = vpow.pop %v1976
      %v1978 = vmul.f32 %v1870, 1.442695
      %v1979 = vpow.pop %v1978
      %v1980 = vmul.f32 %v1871, 1.442695
      %v1981 = vpow.pop %v1980
      %v1982 = vmul.f32 %v1872, 1.442695
      %v1983 = vpow.pop %v1982
      %v1984 = vmul.f32 %v1873, 1.442695
      %v1985 = vpow.pop %v1984
      %v1986 = vmul.f32 %v1874, 1.442695
      %v1987 = vpow.pop %v1986
      %v1988 = vmul.f32 %v1875, 1.442695
      %v1989 = vpow.pop %v1988
      %v1990 = vmul.f32 %v1876, 1.442695
      %v1991 = vpow.pop %v1990
      %v1992 = vmul.f32 %v1877, 1.442695
      %v1993 = vpow.pop %v1992
      %v1994 = vmul.f32 %v1878, 1.442695
      %v1995 = vpow.pop %v1994
      %v1996 = vmul.f32 %v1879, 1.442695
      %v1997 = vpow.pop %v1996
      %v1998 = vmul.f32 %v1880, 1.442695
      %v1999 = vpow.pop %v1998
      %v2000 = vmul.f32 %v1881, 1.442695
      %v2001 = vpow.pop %v2000
      %v2002 = vmul.f32 %v1882, 1.442695
      %v2003 = vpow.pop %v2002
      %v2004 = vmul.f32 %v1883, 1.442695
      %v2005 = vpow.pop %v2004
      %v2006 = vmul.f32 %v1884, 1.442695
      %v2007 = vpow.pop %v2006
      %v2008 = vmul.f32 %v1885, 1.442695
      %v2009 = vpow.pop %v2008
      %v2010 = vmul.f32 %v1886, 1.442695
      %v2011 = vpow.pop %v2010
      %v2012 = vmul.f32 %v1887, 1.442695
      %v2013 = vpow.pop %v2012
      %v2014 = vmul.f32 %v1888, 1.442695
      %v2015 = vpow.pop %v2014
      %v2016 = vmul.f32 %v1889, 1.442695
      %v2017 = vpow.pop %v2016
      %v2018 = vmul.f32 %v1890, 1.442695
      %v2019 = vpow.pop %v2018
      %v2020 = vmul.f32 %v1891, 1.442695
      %v2021 = vpow.pop %v2020
      %v2022 = vmul.f32 %v1892, 1.442695
      %v2023 = vpow.pop %v2022
      %v2024 = vmul.f32 %v1893, 1.442695
      %v2025 = vpow.pop %v2024
      %v2026 = vmul.f32 %v1894, 1.442695
      %v2027 = vpow.pop %v2026
      %v2028 = vmul.f32 %v1895, 1.442695
      %v2029 = vpow.pop %v2028
      %v2030 = vmul.f32 %v1896, 1.442695
      %v2031 = vpow.pop %v2030
      %v2032 = vmul.f32 %v1897, 1.442695
      %v2033 = vpow.pop %v2032
      %v2034 = vmul.f32 %v1898, 1.442695
      %v2035 = vpow.pop %v2034
      %v2036 = vmul.f32 %v1899, 1.442695
      %v2037 = vpow.pop %v2036
      %v2038 = vmul.f32 %v1900, 1.442695
      %v2039 = vpow.pop %v2038
      %v2040 = vmul.f32 %v1901, 1.442695
      %v2041 = vpow.pop %v2040
      %v2042 = vmul.f32 %v1902, 1.442695
      %v2043 = vpow.pop %v2042
      %v2044 = vmul.f32 %v1903, 1.442695
      %v2045 = vpow.pop %v2044
      %v2046 = vmul.f32 %v1904, 1.442695
      %v2047 = vpow.pop %v2046
      %v2048 = vmul.f32 %v1905, 1.442695
      %v2049 = vpow.pop %v2048
      %v2050 = vmul.f32 %v1906, 1.442695
      %v2051 = vpow.pop %v2050
      %v2052 = vmul.f32 %v1907, 1.442695
      %v2053 = vpow.pop %v2052
      %v2054 = vmul.f32 %v1908, 1.442695
      %v2055 = vpow.pop %v2054
      %v2056 = vmul.f32 %v1909, 1.442695
      %v2057 = vpow.pop %v2056
      %v2058 = vmul.f32 %v1910, 1.442695
      %v2059 = vpow.pop %v2058
      %v2060 = vmul.f32 %v1911, 1.442695
      %v2061 = vpow.pop %v2060
      %v2062 = vmul.f32 %v1912, 1.442695
      %v2063 = vpow.pop %v2062
      %v2064 = vmul.f32 %v1913, 1.442695
      %v2065 = vpow.pop %v2064
      %v2066 = vadd.f32 %v1915, 1.0
      %v2067 = vadd.f32 %v1917, 1.0
      %v2068 = vadd.f32 %v1919, 1.0
      %v2069 = vadd.f32 %v1921, 1.0
      %v2070 = vadd.f32 %v1923, 1.0
      %v2071 = vadd.f32 %v1925, 1.0
      %v2072 = vadd.f32 %v1927, 1.0
      %v2073 = vadd.f32 %v1929, 1.0
      %v2074 = vadd.f32 %v1931, 1.0
      %v2075 = vadd.f32 %v1933, 1.0
      %v2076 = vadd.f32 %v1935, 1.0
      %v2077 = vadd.f32 %v1937, 1.0
      %v2078 = vadd.f32 %v1939, 1.0
      %v2079 = vadd.f32 %v1941, 1.0
      %v2080 = vadd.f32 %v1943, 1.0
      %v2081 = vadd.f32 %v1945, 1.0
      %v2082 = vadd.f32 %v1947, 1.0
      %v2083 = vadd.f32 %v1949, 1.0
      %v2084 = vadd.f32 %v1951, 1.0
      %v2085 = vadd.f32 %v1953, 1.0
      %v2086 = vadd.f32 %v1955, 1.0
      %v2087 = vadd.f32 %v1957, 1.0
      %v2088 = vadd.f32 %v1959, 1.0
      %v2089 = vadd.f32 %v1961, 1.0
      %v2090 = vadd.f32 %v1963, 1.0
      %v2091 = vadd.f32 %v1965, 1.0
      %v2092 = vadd.f32 %v1967, 1.0
      %v2093 = vadd.f32 %v1969, 1.0
      %v2094 = vadd.f32 %v1971, 1.0
      %v2095 = vadd.f32 %v1973, 1.0
      %v2096 = vadd.f32 %v1975, 1.0
      %v2097 = vadd.f32 %v1977, 1.0
      %v2098 = vadd.f32 %v1979, 1.0
      %v2099 = vadd.f32 %v1981, 1.0
      %v2100 = vadd.f32 %v1983, 1.0
      %v2101 = vadd.f32 %v1985, 1.0
      %v2102 = vadd.f32 %v1987, 1.0
      %v2103 = vadd.f32 %v1989, 1.0
      %v2104 = vadd.f32 %v1991, 1.0
      %v2105 = vadd.f32 %v1993, 1.0
      %v2106 = vadd.f32 %v1995, 1.0
      %v2107 = vadd.f32 %v1997, 1.0
      %v2108 = vadd.f32 %v1999, 1.0
      %v2109 = vadd.f32 %v2001, 1.0
      %v2110 = vadd.f32 %v2003, 1.0
      %v2111 = vadd.f32 %v2005, 1.0
      %v2112 = vadd.f32 %v2007, 1.0
      %v2113 = vadd.f32 %v2009, 1.0
      %v2114 = vadd.f32 %v2011, 1.0
      %v2115 = vadd.f32 %v2013, 1.0
      %v2116 = vadd.f32 %v2015, 1.0
      %v2117 = vadd.f32 %v2017, 1.0
      %v2118 = vadd.f32 %v2019, 1.0
      %v2119 = vadd.f32 %v2021, 1.0
      %v2120 = vadd.f32 %v2023, 1.0
      %v2121 = vadd.f32 %v2025, 1.0
      %v2122 = vadd.f32 %v2027, 1.0
      %v2123 = vadd.f32 %v2029, 1.0
      %v2124 = vadd.f32 %v2031, 1.0
      %v2125 = vadd.f32 %v2033, 1.0
      %v2126 = vadd.f32 %v2035, 1.0
      %v2127 = vadd.f32 %v2037, 1.0
      %v2128 = vadd.f32 %v2039, 1.0
      %v2129 = vadd.f32 %v2041, 1.0
      %v2130 = vadd.f32 %v2043, 1.0
      %v2131 = vadd.f32 %v2045, 1.0
      %v2132 = vadd.f32 %v2047, 1.0
      %v2133 = vadd.f32 %v2049, 1.0
      %v2134 = vadd.f32 %v2051, 1.0
      %v2135 = vadd.f32 %v2053, 1.0
      %v2136 = vadd.f32 %v2055, 1.0
      %v2137 = vadd.f32 %v2057, 1.0
      %v2138 = vadd.f32 %v2059, 1.0
      %v2139 = vadd.f32 %v2061, 1.0
      %v2140 = vadd.f32 %v2063, 1.0
      %v2141 = vadd.f32 %v2065, 1.0
      %v2142 = vrcp.pop %v2066
      %v2143 = vmul.f32 1.0, %v2142
      %v2144 = vrcp.pop %v2067
      %v2145 = vmul.f32 1.0, %v2144
      %v2146 = vrcp.pop %v2068
      %v2147 = vmul.f32 1.0, %v2146
      %v2148 = vrcp.pop %v2069
      %v2149 = vmul.f32 1.0, %v2148
      %v2150 = vrcp.pop %v2070
      %v2151 = vmul.f32 1.0, %v2150
      %v2152 = vrcp.pop %v2071
      %v2153 = vmul.f32 1.0, %v2152
      %v2154 = vrcp.pop %v2072
      %v2155 = vmul.f32 1.0, %v2154
      %v2156 = vrcp.pop %v2073
      %v2157 = vmul.f32 1.0, %v2156
      %v2158 = vrcp.pop %v2074
      %v2159 = vmul.f32 1.0, %v2158
      %v2160 = vrcp.pop %v2075
      %v2161 = vmul.f32 1.0, %v2160
      %v2162 = vrcp.pop %v2076
      %v2163 = vmul.f32 1.0, %v2162
      %v2164 = vrcp.pop %v2077
      %v2165 = vmul.f32 1.0, %v2164
      %v2166 = vrcp.pop %v2078
      %v2167 = vmul.f32 1.0, %v2166
      %v2168 = vrcp.pop %v2079
      %v2169 = vmul.f32 1.0, %v2168
      %v2170 = vrcp.pop %v2080
      %v2171 = vmul.f32 1.0, %v2170
      %v2172 = vrcp.pop %v2081
      %v2173 = vmul.f32 1.0, %v2172
      %v2174 = vrcp.pop %v2082
      %v2175 = vmul.f32 1.0, %v2174
      %v2176 = vrcp.pop %v2083
      %v2177 = vmul.f32 1.0, %v2176
      %v2178 = vrcp.pop %v2084
      %v2179 = vmul.f32 1.0, %v2178
      %v2180 = vrcp.pop %v2085
      %v2181 = vmul.f32 1.0, %v2180
      %v2182 = vrcp.pop %v2086
      %v2183 = vmul.f32 1.0, %v2182
      %v2184 = vrcp.pop %v2087
      %v2185 = vmul.f32 1.0, %v2184
      %v2186 = vrcp.pop %v2088
      %v2187 = vmul.f32 1.0, %v2186
      %v2188 = vrcp.pop %v2089
      %v2189 = vmul.f32 1.0, %v2188
      %v2190 = vrcp.pop %v2090
      %v2191 = vmul.f32 1.0, %v2190
      %v2192 = vrcp.pop %v2091
      %v2193 = vmul.f32 1.0, %v2192
      %v2194 = vrcp.pop %v2092
      %v2195 = vmul.f32 1.0, %v2194
      %v2196 = vrcp.pop %v2093
      %v2197 = vmul.f32 1.0, %v2196
      %v2198 = vrcp.pop %v2094
      %v2199 = vmul.f32 1.0, %v2198
      %v2200 = vrcp.pop %v2095
      %v2201 = vmul.f32 1.0, %v2200
      %v2202 = vrcp.pop %v2096
      %v2203 = vmul.f32 1.0, %v2202
      %v2204 = vrcp.pop %v2097
      %v2205 = vmul.f32 1.0, %v2204
      %v2206 = vrcp.pop %v2098
      %v2207 = vmul.f32 1.0, %v2206
      %v2208 = vrcp.pop %v2099
      %v2209 = vmul.f32 1.0, %v2208
      %v2210 = vrcp.pop %v2100
      %v2211 = vmul.f32 1.0, %v2210
      %v2212 = vrcp.pop %v2101
      %v2213 = vmul.f32 1.0, %v2212
      %v2214 = vrcp.pop %v2102
      %v2215 = vmul.f32 1.0, %v2214
      %v2216 = vrcp.pop %v2103
      %v2217 = vmul.f32 1.0, %v2216
      %v2218 = vrcp.pop %v2104
      %v2219 = vmul.f32 1.0, %v2218
      %v2220 = vrcp.pop %v2105
      %v2221 = vmul.f32 1.0, %v2220
      %v2222 = vrcp.pop %v2106
      %v2223 = vmul.f32 1.0, %v2222
      %v2224 = vrcp.pop %v2107
      %v2225 = vmul.f32 1.0, %v2224
      %v2226 = vrcp.pop %v2108
      %v2227 = vmul.f32 1.0, %v2226
      %v2228 = vrcp.pop %v2109
      %v2229 = vmul.f32 1.0, %v2228
      %v2230 = vrcp.pop %v2110
      %v2231 = vmul.f32 1.0, %v2230
      %v2232 = vrcp.pop %v2111
      %v2233 = vmul.f32 1.0, %v2232
      %v2234 = vrcp.pop %v2112
      %v2235 = vmul.f32 1.0, %v2234
      %v2236 = vrcp.pop %v2113
      %v2237 = vmul.f32 1.0, %v2236
      %v2238 = vrcp.pop %v2114
      %v2239 = vmul.f32 1.0, %v2238
      %v2240 = vrcp.pop %v2115
      %v2241 = vmul.f32 1.0, %v2240
      %v2242 = vrcp.pop %v2116
      %v2243 = vmul.f32 1.0, %v2242
      %v2244 = vrcp.pop %v2117
      %v2245 = vmul.f32 1.0, %v2244
      %v2246 = vrcp.pop %v2118
      %v2247 = vmul.f32 1.0, %v2246
      %v2248 = vrcp.pop %v2119
      %v2249 = vmul.f32 1.0, %v2248
      %v2250 = vrcp.pop %v2120
      %v2251 = vmul.f32 1.0, %v2250
      %v2252 = vrcp.pop %v2121
      %v2253 = vmul.f32 1.0, %v2252
      %v2254 = vrcp.pop %v2122
      %v2255 = vmul.f32 1.0, %v2254
      %v2256 = vrcp.pop %v2123
      %v2257 = vmul.f32 1.0, %v2256
      %v2258 = vrcp.pop %v2124
      %v2259 = vmul.f32 1.0, %v2258
      %v2260 = vrcp.pop %v2125
      %v2261 = vmul.f32 1.0, %v2260
      %v2262 = vrcp.pop %v2126
      %v2263 = vmul.f32 1.0, %v2262
      %v2264 = vrcp.pop %v2127
      %v2265 = vmul.f32 1.0, %v2264
      %v2266 = vrcp.pop %v2128
      %v2267 = vmul.f32 1.0, %v2266
      %v2268 = vrcp.pop %v2129
      %v2269 = vmul.f32 1.0, %v2268
      %v2270 = vrcp.pop %v2130
      %v2271 = vmul.f32 1.0, %v2270
      %v2272 = vrcp.pop %v2131
      %v2273 = vmul.f32 1.0, %v2272
      %v2274 = vrcp.pop %v2132
      %v2275 = vmul.f32 1.0, %v2274
      %v2276 = vrcp.pop %v2133
      %v2277 = vmul.f32 1.0, %v2276
      %v2278 = vrcp.pop %v2134
      %v2279 = vmul.f32 1.0, %v2278
      %v2280 = vrcp.pop %v2135
      %v2281 = vmul.f32 1.0, %v2280
      %v2282 = vrcp.pop %v2136
      %v2283 = vmul.f32 1.0, %v2282
      %v2284 = vrcp.pop %v2137
      %v2285 = vmul.f32 1.0, %v2284
      %v2286 = vrcp.pop %v2138
      %v2287 = vmul.f32 1.0, %v2286
      %v2288 = vrcp.pop %v2139
      %v2289 = vmul.f32 1.0, %v2288
      %v2290 = vrcp.pop %v2140
      %v2291 = vmul.f32 1.0, %v2290
      %v2292 = vrcp.pop %v2141
      %v2293 = vmul.f32 1.0, %v2292
      %2294 = vst [vmem:[#allocation9] sm:$0xff] %v2143
      %2295 = vst [vmem:[#allocation9 + $0x8] sm:$0xff] %v2145
      %2296 = vst [vmem:[#allocation9 + $0x10] sm:$0xff] %v2147
      %2297 = vst [vmem:[#allocation9 + $0x18] sm:$0xff] %v2149
      %2298 = vst [vmem:[#allocation9 + $0x20] sm:$0xff] %v2151
      %2299 = vst [vmem:[#allocation9 + $0x28] sm:$0xff] %v2153
      %2300 = vst [vmem:[#allocation9 + $0x30] sm:$0xff] %v2155
      %2301 = vst [vmem:[#allocation9 + $0x38] sm:$0xff] %v2157
      %2302 = vst [vmem:[#allocation9 + $0x40] sm:$0xff] %v2159
      %2303 = vst [vmem:[#allocation9 + $0x48] sm:$0xff] %v2161
      %2304 = vst [vmem:[#allocation9 + $0x50] sm:$0xff] %v2163
      %2305 = vst [vmem:[#allocation9 + $0x58] sm:$0xff] %v2165
      %2306 = vst [vmem:[#allocation9 + $0x60] sm:$0xff] %v2167
      %2307 = vst [vmem:[#allocation9 + $0x68] sm:$0xff] %v2169
      %2308 = vst [vmem:[#allocation9 + $0x70] sm:$0xff] %v2171
      %2309 = vst [vmem:[#allocation9 + $0x78] sm:$0xff] %v2173
      %2310 = vst [vmem:[#allocation9 + $0x80] sm:$0xff] %v2175
      %2311 = vst [vmem:[#allocation9 + $0x88] sm:$0xff] %v2177
      %2312 = vst [vmem:[#allocation9 + $0x90] sm:$0xff] %v2179
      %2313 = vst [vmem:[#allocation9 + $0x98] sm:$0xff] %v2181
      %2314 = vst [vmem:[#allocation9 + $0xa0] sm:$0xff] %v2183
      %2315 = vst [vmem:[#allocation9 + $0xa8] sm:$0xff] %v2185
      %2316 = vst [vmem:[#allocation9 + $0xb0] sm:$0xff] %v2187
      %2317 = vst [vmem:[#allocation9 + $0xb8] sm:$0xff] %v2189
      %2318 = vst [vmem:[#allocation9 + $0xc0] sm:$0xff] %v2191
      %2319 = vst [vmem:[#allocation9 + $0xc8] sm:$0xff] %v2193
      %2320 = vst [vmem:[#allocation9 + $0xd0] sm:$0xff] %v2195
      %2321 = vst [vmem:[#allocation9 + $0xd8] sm:$0xff] %v2197
      %2322 = vst [vmem:[#allocation9 + $0xe0] sm:$0xff] %v2199
      %2323 = vst [vmem:[#allocation9 + $0xe8] sm:$0xff] %v2201
      %2324 = vst [vmem:[#allocation9 + $0xf0] sm:$0xff] %v2203
      %2325 = vst [vmem:[#allocation9 + $0xf8] sm:$0xff] %v2205
      %2326 = vst [vmem:[#allocation9 + $0x100] sm:$0xff] %v2207
      %2327 = vst [vmem:[#allocation9 + $0x108] sm:$0xff] %v2209
      %2328 = vst [vmem:[#allocation9 + $0x110] sm:$0xff] %v2211
      %2329 = vst [vmem:[#allocation9 + $0x118] sm:$0xff] %v2213
      %2330 = vst [vmem:[#allocation9 + $0x120] sm:$0xff] %v2215
      %2331 = vst [vmem:[#allocation9 + $0x128] sm:$0xff] %v2217
      %2332 = vst [vmem:[#allocation9 + $0x130] sm:$0xff] %v2219
      %2333 = vst [vmem:[#allocation9 + $0x138] sm:$0xff] %v2221
      %2334 = vst [vmem:[#allocation9 + $0x140] sm:$0xff] %v2223
      %2335 = vst [vmem:[#allocation9 + $0x148] sm:$0xff] %v2225
      %2336 = vst [vmem:[#allocation9 + $0x150] sm:$0xff] %v2227
      %2337 = vst [vmem:[#allocation9 + $0x158] sm:$0xff] %v2229
      %2338 = vst [vmem:[#allocation9 + $0x160] sm:$0xff] %v2231
      %2339 = vst [vmem:[#allocation9 + $0x168] sm:$0xff] %v2233
      %2340 = vst [vmem:[#allocation9 + $0x170] sm:$0xff] %v2235
      %2341 = vst [vmem:[#allocation9 + $0x178] sm:$0xff] %v2237
      %2342 = vst [vmem:[#allocation9 + $0x180] sm:$0xff] %v2239
      %2343 = vst [vmem:[#allocation9 + $0x188] sm:$0xff] %v2241
      %2344 = vst [vmem:[#allocation9 + $0x190] sm:$0xff] %v2243
      %2345 = vst [vmem:[#allocation9 + $0x198] sm:$0xff] %v2245
      %2346 = vst [vmem:[#allocation9 + $0x1a0] sm:$0xff] %v2247
      %2347 = vst [vmem:[#allocation9 + $0x1a8] sm:$0xff] %v2249
      %2348 = vst [vmem:[#allocation9 + $0x1b0] sm:$0xff] %v2251
      %2349 = vst [vmem:[#allocation9 + $0x1b8] sm:$0xff] %v2253
      %2350 = vst [vmem:[#allocation9 + $0x1c0] sm:$0xff] %v2255
      %2351 = vst [vmem:[#allocation9 + $0x1c8] sm:$0xff] %v2257
      %2352 = vst [vmem:[#allocation9 + $0x1d0] sm:$0xff] %v2259
      %2353 = vst [vmem:[#allocation9 + $0x1d8] sm:$0xff] %v2261
      %2354 = vst [vmem:[#allocation9 + $0x1e0] sm:$0xff] %v2263
      %2355 = vst [vmem:[#allocation9 + $0x1e8] sm:$0xff] %v2265
      %2356 = vst [vmem:[#allocation9 + $0x1f0] sm:$0xff] %v2267
      %2357 = vst [vmem:[#allocation9 + $0x1f8] sm:$0xff] %v2269
      %2358 = vst [vmem:[#allocation9 + $0x200] sm:$0xff] %v2271
      %2359 = vst [vmem:[#allocation9 + $0x208] sm:$0xff] %v2273
      %2360 = vst [vmem:[#allocation9 + $0x210] sm:$0xff] %v2275
      %2361 = vst [vmem:[#allocation9 + $0x218] sm:$0xff] %v2277
      %2362 = vst [vmem:[#allocation9 + $0x220] sm:$0xff] %v2279
      %2363 = vst [vmem:[#allocation9 + $0x228] sm:$0xff] %v2281
      %2364 = vst [vmem:[#allocation9 + $0x230] sm:$0xff] %v2283
      %2365 = vst [vmem:[#allocation9 + $0x238] sm:$0xff] %v2285
      %2366 = vst [vmem:[#allocation9 + $0x240] sm:$0xff] %v2287
      %2367 = vst [vmem:[#allocation9 + $0x248] sm:$0xff] %v2289
      %2368 = vst [vmem:[#allocation9 + $0x250] sm:$0xf] %v2291
      %2369 = vst [vmem:[#allocation9 + $0x258] sm:$0xf] %v2293
    $region41: #{tpu_custom_call.1} parent=1 // pred_fallthru
      _
    // Predicated region
    $region42: #{tpu_custom_call.1} parent=1 // pred_check
      _
    $region43: #{tpu_custom_call.1} parent=1 // pred_check_branch
      %2371 = sbr.rel (0) target = $region45
    $region44: #{tpu_custom_call.1} parent=1 // pred_region
      %s2373 = ssub.s32 9728, 9728
      %2374 = vsyncadd [#allocation5], %s2373
      %s2375 = sshll.u32 [#allocation9], 4
      %s2376 = int_to_ptr.vmem [resolvable:$true] %s2375
      %2381 = dma.vmem_to_hbm [thread:$0]  %s2376, 9728, %s5, [#allocation5], 256, 256, 16
    $region45: #{tpu_custom_call.1} parent=1 // pred_fallthru
      _
    // Predicated region
    $region46: #{tpu_custom_call.1} parent=1 // pred_check
      _
    $region47: #{tpu_custom_call.1} parent=1 // pred_check_branch
      %2383 = sbr.rel (0) target = $region49
    $region48: #{tpu_custom_call.1} parent=1 // pred_region
      %s2385 = ssub.s32 4864, 4864
      %2386 = vsyncadd [#allocation11], %s2385
      %s2387 = sshll.u32 [#allocation10], 4
      %s2388 = int_to_ptr.vmem [resolvable:$true] %s2387
      %2393 = dma.vmem_to_hbm [thread:$0]  %s2388, 4864, %s6, [#allocation11], 128, 128, 8
    $region49: #{tpu_custom_call.1} parent=1 // pred_fallthru
      _
    // Predicated region
    $region50: #{tpu_custom_call.1} parent=1 // pred_check
      _
    $region51: #{tpu_custom_call.1} parent=1 // pred_check_branch
      %2395 = sbr.rel (0) target = $region53
    $region52: #{tpu_custom_call.1} parent=1 // pred_region
      %2396 = dma.done [#allocation5], 9728
    $region53: #{tpu_custom_call.1} parent=1 // pred_fallthru
      _
    // Predicated region
    $region54: #{tpu_custom_call.1} parent=1 // pred_check
      _
    $region55: #{tpu_custom_call.1} parent=1 // pred_check_branch
      %2398 = sbr.rel (0) target = $region57
    $region56: #{tpu_custom_call.1} parent=1 // pred_region
      %2399 = dma.done [#allocation11], 4864
    $region57: #{tpu_custom_call.1} parent=1 // pred_fallthru
      _
    %2400 = vsyncpa [#allocation4], 1
    %2401 = vsyncpa [#allocation7], 1
    %2402 = vsyncpa [#allocation5], 1
    %2403 = vsyncpa [#allocation11], 1

</llo_original>
